<compile_context>
chip_gen: v7x
topology: tpu7x:2x2x1
jax: 0.10.0
libtpu: 0.0.40
codegen_flags: <defaults>
</compile_context>

<pallas_src>
import functools

import jax
import jax.numpy as jnp
import numpy as np
from jax.experimental import pallas as pl
from jax.experimental.pallas import tpu as pltpu


# ------------------------- static interpolation matrices -----------------------
def _bilinear_matrix(n_in, n_out):
    """(n_out, n_in) matrix M such that M @ x is 1-D linear resize, align_corners=True."""
    A = np.zeros((n_out, n_in), np.float32)
    if n_in == 1:
        A[:, 0] = 1.0
        return A
    scale = (n_in - 1) / (n_out - 1)
    for o in range(n_out):
        src = o * scale
        i0 = min(int(np.floor(src)), n_in - 2)
        w = src - i0
        A[o, i0] += 1.0 - w
        A[o, i0 + 1] += w
    return A


def _banded_conv_weights(w_hwio, w_out, pad_out):
    """Stack of 3 banded matrices (one per kernel row dh).

    B[dh] : ((w_out+2)*Cin, (w_out+2*pad_out)*Cout) maps a lane-packed
    zero-padded input row band (W,C interleaved) to a lane-packed (optionally
    zero-padded) output row, so the 3x3 conv becomes three lane-dense MXU
    matmuls (N = full row width) instead of an im2col matmul with N = Cout.
    """
    _, _, cin, cout = w_hwio.shape
    wp_in = w_out + 2
    wp_out = w_out + 2 * pad_out
    w_idx = jnp.arange(w_out)
    mats = []
    for dh in range(3):
        bm = jnp.zeros((wp_in, cin, wp_out, cout), w_hwio.dtype)
        for dw in range(3):
            bm = bm.at[w_idx + dw, :, w_idx + pad_out, :].add(w_hwio[dh, dw])
        mats.append(bm.reshape(wp_in * cin, wp_out * cout))
    return jnp.stack(mats, axis=0)


# ------------------------------- fused kernel ----------------------------------
def _upsampling_kernel(x1_ref, x2_ref, ah_ref, awc1_ref, p2_ref,
                       b1_ref, b2_ref, bias1_ref, bias2_ref, o_ref,
                       pad1_ref, pad2_ref, *, H2, W2, Cin, Cmid):
    # Halo: only the top/bottom rows need zeroing (the left/right pad column
    # groups come out exactly zero from the placement / banded matmuls), and
    # only once -- the interior rows are fully overwritten every grid step.
    @pl.when(pl.program_id(0) == 0)
    def _init():
        z1 = jnp.zeros((1, (W2 + 2) * Cin), pad1_ref.dtype)
        pad1_ref[0:1, :] = z1
        pad1_ref[H2 + 1:H2 + 2, :] = z1
        z2 = jnp.zeros((1, (W2 + 2) * Cmid), pad2_ref.dtype)
        pad2_ref[0:1, :] = z2
        pad2_ref[H2 + 1:H2 + 2, :] = z2

    # 1. bilinear 2x upsample of x1 + channel-concat with x2, written directly
    #    into the zero-padded lane-packed layout -- three MXU matmuls (compute
    #    dtype operands, f32 accumulation), no gathers / concats / reshapes.
    up_h = jnp.dot(ah_ref[...], x1_ref[0],
                   preferred_element_type=jnp.float32)          # (H2, W1*C1)
    row = jnp.dot(up_h.astype(awc1_ref.dtype), awc1_ref[...],
                  preferred_element_type=jnp.float32)           # (H2, (W2+2)*Cin)
    row = row + jnp.dot(x2_ref[0], p2_ref[...],
                        preferred_element_type=jnp.float32)
    pad1_ref[1:H2 + 1, :] = row.astype(pad1_ref.dtype)

    # 2./3. 3x3 conv (+ BN scale folded into weights) = three banded matmuls
    #       with lane-dense N, then bias-add + ReLU in f32.  conv1's output is
    #       produced already in the zero-padded packed layout conv2 expects.
    def conv3x3(pad_ref, b_ref, bias_ref):
        acc = jnp.dot(pad_ref[0:H2, :], b_ref[0],
                      preferred_element_type=jnp.float32)
        acc = acc + jnp.dot(pad_ref[1:H2 + 1, :], b_ref[1],
                            preferred_element_type=jnp.float32)
        acc = acc + jnp.dot(pad_ref[2:H2 + 2, :], b_ref[2],
                            preferred_element_type=jnp.float32)
        return jnp.maximum(acc + bias_ref[...], 0.0)

    y1 = conv3x3(pad1_ref, b1_ref, bias1_ref)                   # (H2, (W2+2)*Cmid)
    pad2_ref[1:H2 + 1, :] = y1.astype(pad2_ref.dtype)

    y2 = conv3x3(pad2_ref, b2_ref, bias2_ref)                   # (H2, W2*Cout)
    o_ref[0] = y2.astype(o_ref.dtype)                           # lane-dense store


# ------------------------------- wrapper ---------------------------------------
def upsampling_forward(x1_nchw, x2_nchw, params, compute_dtype=jnp.bfloat16):
    B, C1, H1, W1 = x1_nchw.shape
    B2, C2, H2, W2 = x2_nchw.shape
    assert B == B2
    # TODO(synk): general F.pad(diffX, diffY) path for odd/mismatched encoder
    # sizes is not implemented; standard UNet shapes give an exact 2x match.
    assert H2 == 2 * H1 and W2 == 2 * W1

    Cin = C1 + C2
    Cmid = params["w1_hwio"].shape[-1]
    Cout = params["w2_hwio"].shape[-1]

    # NCHW -> lane-packed (B, H, W*C) in the MXU compute dtype.
    # TODO(synk): accept NHWC at the boundary (or DMA NCHW and relayout in-kernel
    # with pltpu.einshape) to drop these extra HBM passes.
    x1p = jnp.transpose(x1_nchw, (0, 2, 3, 1)).reshape(B, H1, W1 * C1).astype(compute_dtype)
    x2p = jnp.transpose(x2_nchw, (0, 2, 3, 1)).reshape(B, H2, W2 * C2).astype(compute_dtype)

    # Row-interp matrix; fused (column-interp + channel placement) matrix for x1;
    # placement matrix for x2.  Columns target the *padded* packed concat layout
    # ((w+1)*Cin + c), so the left/right zero-pad falls out of the matmuls.
    ah = jnp.asarray(_bilinear_matrix(H1, H2)).astype(compute_dtype)      # (H2, H1)
    aw = _bilinear_matrix(W1, W2)                                         # (W2, W1)
    base = np.kron(aw.T, np.eye(C1, dtype=np.float32))                    # (W1*C1, W2*C1)
    awc1 = np.zeros((W1 * C1, (W2 + 2) * Cin), np.float32)
    up_cols = ((np.arange(W2)[:, None] + 1) * Cin + C2
               + np.arange(C1)[None, :]).reshape(-1)
    awc1[:, up_cols] = base
    p2 = np.zeros((W2 * C2, (W2 + 2) * Cin), np.float32)
    x2_cols = ((np.arange(W2)[:, None] + 1) * Cin
               + np.arange(C2)[None, :]).reshape(-1)
    p2[np.arange(W2 * C2), x2_cols] = 1.0
    awc1 = jnp.asarray(awc1).astype(compute_dtype)
    p2 = jnp.asarray(p2).astype(compute_dtype)

    # Fold BN scale into the conv weights (kernel epilogue = bias + ReLU), then
    # turn each 3x3 conv into 3 banded, lane-dense weight matrices.
    w1f = params["w1_hwio"] * params["scale1"][None, None, None, :]
    w2f = params["w2_hwio"] * params["scale2"][None, None, None, :]
    b1 = _banded_conv_weights(w1f, W2, pad_out=1).astype(compute_dtype)  # (3,(W2+2)Cin,(W2+2)Cmid)
    b2 = _banded_conv_weights(w2f, W2, pad_out=0).astype(compute_dtype)  # (3,(W2+2)Cmid,W2*Cout)

    bias1 = (jnp.zeros((W2 + 2, Cmid), jnp.float32)
             .at[1:W2 + 1, :].set(params["shift1"])
             .reshape(1, (W2 + 2) * Cmid))                               # zero on pad cols
    bias2 = jnp.tile(params["shift2"][None, :], (W2, 1)).reshape(1, W2 * Cout)

    kernel = functools.partial(_upsampling_kernel, H2=H2, W2=W2, Cin=Cin, Cmid=Cmid)

    out_packed = pl.pallas_call(
        kernel,
        out_shape=jax.ShapeDtypeStruct((B, H2, W2 * Cout), x1_nchw.dtype),
        grid_spec=pltpu.PrefetchScalarGridSpec(
            num_scalar_prefetch=0,
            grid=(B,),   # "parallel" batch axis: feeds both v7x TensorCores
            in_specs=[
                pl.BlockSpec((1, H1, W1 * C1), lambda b: (b, 0, 0)),            # x1 packed
                pl.BlockSpec((1, H2, W2 * C2), lambda b: (b, 0, 0)),            # x2 packed
                pl.BlockSpec((H2, H1), lambda b: (0, 0)),                       # A_h
                pl.BlockSpec((W1 * C1, (W2 + 2) * Cin), lambda b: (0, 0)),      # A_wc + place
                pl.BlockSpec((W2 * C2, (W2 + 2) * Cin), lambda b: (0, 0)),      # x2 place
                pl.BlockSpec((3, (W2 + 2) * Cin, (W2 + 2) * Cmid), lambda b: (0, 0, 0)),
                pl.BlockSpec((3, (W2 + 2) * Cmid, W2 * Cout), lambda b: (0, 0, 0)),
                pl.BlockSpec((1, (W2 + 2) * Cmid), lambda b: (0, 0)),           # bias1
                pl.BlockSpec((1, W2 * Cout), lambda b: (0, 0)),                 # bias2
            ],
            out_specs=pl.BlockSpec((1, H2, W2 * Cout), lambda b: (b, 0, 0)),
            scratch_shapes=[
                pltpu.VMEM((H2 + 2, (W2 + 2) * Cin), compute_dtype),    # padded concat
                pltpu.VMEM((H2 + 2, (W2 + 2) * Cmid), compute_dtype),   # padded conv1 out
            ],
        ),
        compiler_params=pltpu.CompilerParams(dimension_semantics=("parallel",)),
    )(x1p, x2p, ah, awc1, p2, b1, b2, bias1, bias2)

    out = out_packed.reshape(B, H2, W2, Cout)
    return jnp.transpose(out, (0, 3, 1, 2))                             # NHWC -> NCHW


# ----------------------------- parameter setup ---------------------------------
def init_params(key, in_channels, out_channels, eps=1e-5):
    # Bilinear branch of UpSampling: DoubleConv(in, out, mid=in // 2).  The spec's
    # DoubleConv applies BatchNorm2d(mid) to the first conv's output, so it is
    # only shape-consistent when mid == out (as chosen in this test).
    mid_channels = in_channels // 2
    assert mid_channels == out_channels

    ks = jax.random.split(key, 10)
    w1_oihw = 0.1 * jax.random.normal(ks[0], (out_channels, in_channels, 3, 3), jnp.float32)
    w2_oihw = 0.1 * jax.random.normal(ks[1], (out_channels, mid_channels, 3, 3), jnp.float32)

    # TODO(synk): BatchNorm is eval-mode only (running stats folded into
    # scale/shift); training-mode batch statistics are not computed.
    def bn(kg, kb, km, kv, c):
        gamma = 1.0 + 0.1 * jax.random.normal(kg, (c,), jnp.float32)
        beta = 0.1 * jax.random.normal(kb, (c,), jnp.float32)
        mean = 0.1 * jax.random.normal(km, (c,), jnp.float32)
        var = jax.random.uniform(kv, (c,), jnp.float32, minval=0.5, maxval=1.5)
        scale = gamma / jnp.sqrt(var + eps)
        shift = beta - mean * scale
        return scale, shift

    scale1, shift1 = bn(ks[2], ks[3], ks[4], ks[5], mid_channels)
    scale2, shift2 = bn(ks[6], ks[7], ks[8], ks[9], out_channels)

    return dict(
        w1_hwio=jnp.transpose(w1_oihw, (2, 3, 1, 0)),   # (3,3,Cin,Cmid)
        w2_hwio=jnp.transpose(w2_oihw, (2, 3, 1, 0)),   # (3,3,Cmid,Cout)
        scale1=scale1, shift1=shift1, scale2=scale2, shift2=shift2,
    )


# --------------------------- pure-JAX reference check ---------------------------
def _ref_bilinear_up(x_nhwc, h_out, w_out):
    """align_corners=True bilinear resize, independent gather + lerp formulation."""
    _, H, W, _ = x_nhwc.shape

    def grid(n_in, n_out):
        o = jnp.arange(n_out, dtype=jnp.float32)
        src = o * (n_in - 1) / (n_out - 1)
        i0 = jnp.clip(jnp.floor(src).astype(jnp.int32), 0, n_in - 2)
        w = src - i0.astype(jnp.float32)
        return i0, w

    hi0, hw = grid(H, h_out)
    wi0, ww = grid(W, w_out)
    xh = (x_nhwc[:, hi0] * (1.0 - hw)[None, :, None, None]
          + x_nhwc[:, hi0 + 1] * hw[None, :, None, None])
    return (xh[:, :, wi0] * (1.0 - ww)[None, None, :, None]
            + xh[:, :, wi0 + 1] * ww[None, None, :, None])


def ref_forward(x1_nchw, x2_nchw, params):
    x1 = jnp.transpose(x1_nchw, (0, 2, 3, 1))
    x2 = jnp.transpose(x2_nchw, (0, 2, 3, 1))
    _, H2, W2, _ = x2.shape
    x1u = _ref_bilinear_up(x1, H2, W2)
    x = jnp.concatenate([x2, x1u], axis=-1)

    def cbr(y, w_hwio, s, b):
        z = jax.lax.conv_general_dilated(
            y, w_hwio, (1, 1), "SAME",
            dimension_numbers=("NHWC", "HWIO", "NHWC"))
        return jnp.maximum(z * s + b, 0.0)

    x = cbr(x, params["w1_hwio"], params["scale1"], params["shift1"])
    x = cbr(x, params["w2_hwio"], params["scale2"], params["shift2"])
    return jnp.transpose(x, (0, 3, 1, 2))


if __name__ == "__main__":
    # UpSampling(in_channels=16, out_channels=8, bilinear=True):
    #   x1 (decoder feature): (B, in/2, H, W)   = (2, 8, 8, 8)
    #   x2 (skip connection): (B, in/2, 2H, 2W) = (2, 8, 16, 16)
    #   output:               (B, out, 2H, 2W)  = (2, 8, 16, 16)
    B, in_channels, out_channels, H1, W1 = 2, 16, 8, 8, 8
    H2, W2 = 2 * H1, 2 * W1
    C1 = in_channels // 2
    C2 = in_channels - C1

    key = jax.random.PRNGKey(0)
    k1, k2, kp = jax.random.split(key, 3)
    x1 = jax.random.normal(k1, (B, C1, H1, W1), jnp.float32)
    x2 = jax.random.normal(k2, (B, C2, H2, W2), jnp.float32)
    params = init_params(kp, in_channels, out_channels)

    ref = jax.block_until_ready(ref_forward(x1, x2, params))

    # f32 compute path: tight numerical check against the pure-JAX reference.
    out_f32 = jax.block_until_ready(
        upsampling_forward(x1, x2, params, compute_dtype=jnp.float32))
    assert out_f32.shape == (B, out_channels, H2, W2), out_f32.shape
    np.testing.assert_allclose(np.asarray(out_f32), np.asarray(ref),
                               rtol=1e-4, atol=1e-4)

    # Default bf16 MXU path (f32 accumulate + f32 bias/ReLU epilogue): loose check.
    out_bf16 = jax.block_until_ready(upsampling_forward(x1, x2, params))
    assert out_bf16.shape == (B, out_channels, H2, W2), out_bf16.shape
    np.testing.assert_allclose(np.asarray(out_bf16), np.asarray(ref),
                               rtol=5e-2, atol=5e-2)

    print("KERNEL_OK")
</pallas_src>

<mosaic_0001>
module attributes {stable_mosaic.version = 11 : i64} {
  func.func @_upsampling_kernel(%arg0: i32, %arg1: memref<1x8x64xf32, #tpu.memory_space<vmem>>, %arg2: memref<1x16x128xf32, #tpu.memory_space<vmem>>, %arg3: memref<16x8xf32, #tpu.memory_space<vmem>>, %arg4: memref<64x288xf32, #tpu.memory_space<vmem>>, %arg5: memref<128x288xf32, #tpu.memory_space<vmem>>, %arg6: memref<3x288x144xf32, #tpu.memory_space<vmem>>, %arg7: memref<3x144x128xf32, #tpu.memory_space<vmem>>, %arg8: memref<1x144xf32, #tpu.memory_space<vmem>>, %arg9: memref<1x128xf32, #tpu.memory_space<vmem>>, %arg10: memref<1x16x128xf32, #tpu.memory_space<vmem>>, %arg11: memref<18x288xf32, #tpu.memory_space<vmem>>, %arg12: memref<18x144xf32, #tpu.memory_space<vmem>>) attributes {dimension_semantics = [#tpu.dimension_semantics<parallel>], iteration_bounds = array<i64: 2>, scalar_prefetch = 0 : i64, scratch_operands = 2 : i64, tpu.core_type = #tpu.core_type<tc>, window_params = [{transform_indices = @transform_0, window_bounds = array<i64: 1, 8, 64>}, {transform_indices = @transform_1, window_bounds = array<i64: 1, 16, 128>}, {pipeline_mode = #tpu.pipeline_mode<synchronous>, transform_indices = @transform_2, window_bounds = array<i64: 16, 8>}, {pipeline_mode = #tpu.pipeline_mode<synchronous>, transform_indices = @transform_3, window_bounds = array<i64: 64, 288>}, {pipeline_mode = #tpu.pipeline_mode<synchronous>, transform_indices = @transform_4, window_bounds = array<i64: 128, 288>}, {pipeline_mode = #tpu.pipeline_mode<synchronous>, transform_indices = @transform_5, window_bounds = array<i64: 3, 288, 144>}, {pipeline_mode = #tpu.pipeline_mode<synchronous>, transform_indices = @transform_6, window_bounds = array<i64: 3, 144, 128>}, {pipeline_mode = #tpu.pipeline_mode<synchronous>, transform_indices = @transform_7, window_bounds = array<i64: 1, 144>}, {pipeline_mode = #tpu.pipeline_mode<synchronous>, transform_indices = @transform_8, window_bounds = array<i64: 1, 128>}, {transform_indices = @transform_9, window_bounds = array<i64: 1, 16, 128>}]} {
    %c0_i32 = arith.constant 0 : i32
    %0 = arith.cmpi eq, %arg0, %c0_i32 : i32
    %1 = arith.extui %0 : i1 to i32
    %c0_i32_0 = arith.constant 0 : i32
    %2 = arith.cmpi ne, %1, %c0_i32_0 : i32
    scf.if %2 {
      %cst_61 = arith.constant 0.000000e+00 : f32
      %57 = vector.broadcast %cst_61 : f32 to vector<1x288xf32>
      %c0_62 = arith.constant 0 : index
      %c0_63 = arith.constant 0 : index
      %58 = vector.load %arg11[%c0_62, %c0_63] : memref<18x288xf32, #tpu.memory_space<vmem>>, vector<1x288xf32>
      tpu.vector_store %arg11[%c0_62, %c0_63], %57 {strides = array<i32>} : memref<18x288xf32, #tpu.memory_space<vmem>>, vector<1x288xf32>,
      %c17 = arith.constant 17 : index
      %c0_64 = arith.constant 0 : index
      %59 = vector.load %arg11[%c17, %c0_64] : memref<18x288xf32, #tpu.memory_space<vmem>>, vector<1x288xf32>
      tpu.vector_store %arg11[%c17, %c0_64], %57 {strides = array<i32>} : memref<18x288xf32, #tpu.memory_space<vmem>>, vector<1x288xf32>,
      %cst_65 = arith.constant 0.000000e+00 : f32
      %60 = vector.broadcast %cst_65 : f32 to vector<1x144xf32>
      %c0_66 = arith.constant 0 : index
      %c0_67 = arith.constant 0 : index
      %61 = vector.load %arg12[%c0_66, %c0_67] : memref<18x144xf32, #tpu.memory_space<vmem>>, vector<1x144xf32>
      tpu.vector_store %arg12[%c0_66, %c0_67], %60 {strides = array<i32>} : memref<18x144xf32, #tpu.memory_space<vmem>>, vector<1x144xf32>,
      %c17_68 = arith.constant 17 : index
      %c0_69 = arith.constant 0 : index
      %62 = vector.load %arg12[%c17_68, %c0_69] : memref<18x144xf32, #tpu.memory_space<vmem>>, vector<1x144xf32>
      tpu.vector_store %arg12[%c17_68, %c0_69], %60 {strides = array<i32>} : memref<18x144xf32, #tpu.memory_space<vmem>>, vector<1x144xf32>,
    } else {
    }
    %c0 = arith.constant 0 : index
    %c0_1 = arith.constant 0 : index
    %3 = vector.load %arg3[%c0, %c0_1] : memref<16x8xf32, #tpu.memory_space<vmem>>, vector<16x8xf32>
    %c0_2 = arith.constant 0 : index
    %c0_3 = arith.constant 0 : index
    %c0_4 = arith.constant 0 : index
    %4 = vector.load %arg1[%c0_2, %c0_3, %c0_4] : memref<1x8x64xf32, #tpu.memory_space<vmem>>, vector<1x8x64xf32>
    %5 = vector.shape_cast %4 : vector<1x8x64xf32> to vector<8x64xf32>
    %cst = arith.constant dense<0.000000e+00> : vector<16x64xf32>
    %6 = tpu.matmul %3, %5, %cst {dimension_numbers = #tpu.dot_dimension_numbers<[1], [0], [0], [1], [0, 0, 1, 1], [], []>} : vector<16x8xf32>, vector<8x64xf32>, vector<16x64xf32> -> vector<16x64xf32>
    %c0_5 = arith.constant 0 : index
    %c0_6 = arith.constant 0 : index
    %7 = vector.load %arg4[%c0_5, %c0_6] : memref<64x288xf32, #tpu.memory_space<vmem>>, vector<64x288xf32>
    %cst_7 = arith.constant dense<0.000000e+00> : vector<16x288xf32>
    %8 = tpu.matmul %6, %7, %cst_7 {dimension_numbers = #tpu.dot_dimension_numbers<[1], [0], [0], [1], [0, 0, 1, 1], [], []>} : vector<16x64xf32>, vector<64x288xf32>, vector<16x288xf32> -> vector<16x288xf32>
    %c0_8 = arith.constant 0 : index
    %c0_9 = arith.constant 0 : index
    %c0_10 = arith.constant 0 : index
    %9 = vector.load %arg2[%c0_8, %c0_9, %c0_10] : memref<1x16x128xf32, #tpu.memory_space<vmem>>, vector<1x16x128xf32>
    %10 = vector.shape_cast %9 : vector<1x16x128xf32> to vector<16x128xf32>
    %c0_11 = arith.constant 0 : index
    %c0_12 = arith.constant 0 : index
    %11 = vector.load %arg5[%c0_11, %c0_12] : memref<128x288xf32, #tpu.memory_space<vmem>>, vector<128x288xf32>
    %cst_13 = arith.constant dense<0.000000e+00> : vector<16x288xf32>
    %12 = tpu.matmul %10, %11, %cst_13 {dimension_numbers = #tpu.dot_dimension_numbers<[1], [0], [0], [1], [0, 0, 1, 1], [], []>} : vector<16x128xf32>, vector<128x288xf32>, vector<16x288xf32> -> vector<16x288xf32>
    %13 = arith.addf %8, %12 : vector<16x288xf32>
    %c1 = arith.constant 1 : index
    %c0_14 = arith.constant 0 : index
    %14 = vector.load %arg11[%c1, %c0_14] : memref<18x288xf32, #tpu.memory_space<vmem>>, vector<16x288xf32>
    tpu.vector_store %arg11[%c1, %c0_14], %13 {strides = array<i32>} : memref<18x288xf32, #tpu.memory_space<vmem>>, vector<16x288xf32>,
    %c0_15 = arith.constant 0 : index
    %c0_16 = arith.constant 0 : index
    %15 = vector.load %arg11[%c0_15, %c0_16] : memref<18x288xf32, #tpu.memory_space<vmem>>, vector<16x288xf32>
    %c0_17 = arith.constant 0 : index
    %c0_18 = arith.constant 0 : index
    %c0_19 = arith.constant 0 : index
    %16 = vector.load %arg6[%c0_17, %c0_18, %c0_19] : memref<3x288x144xf32, #tpu.memory_space<vmem>>, vector<1x288x144xf32>
    %17 = vector.shape_cast %16 : vector<1x288x144xf32> to vector<288x144xf32>
    %cst_20 = arith.constant dense<0.000000e+00> : vector<16x144xf32>
    %18 = tpu.matmul %15, %17, %cst_20 {dimension_numbers = #tpu.dot_dimension_numbers<[1], [0], [0], [1], [0, 0, 1, 1], [], []>} : vector<16x288xf32>, vector<288x144xf32>, vector<16x144xf32> -> vector<16x144xf32>
    %c1_21 = arith.constant 1 : index
    %c0_22 = arith.constant 0 : index
    %19 = vector.load %arg11[%c1_21, %c0_22] : memref<18x288xf32, #tpu.memory_space<vmem>>, vector<16x288xf32>
    %c1_23 = arith.constant 1 : index
    %c0_24 = arith.constant 0 : index
    %c0_25 = arith.constant 0 : index
    %20 = vector.load %arg6[%c1_23, %c0_24, %c0_25] : memref<3x288x144xf32, #tpu.memory_space<vmem>>, vector<1x288x144xf32>
    %21 = vector.shape_cast %20 : vector<1x288x144xf32> to vector<288x144xf32>
    %cst_26 = arith.constant dense<0.000000e+00> : vector<16x144xf32>
    %22 = tpu.matmul %19, %21, %cst_26 {dimension_numbers = #tpu.dot_dimension_numbers<[1], [0], [0], [1], [0, 0, 1, 1], [], []>} : vector<16x288xf32>, vector<288x144xf32>, vector<16x144xf32> -> vector<16x144xf32>
    %23 = arith.addf %18, %22 : vector<16x144xf32>
    %c2 = arith.constant 2 : index
    %c0_27 = arith.constant 0 : index
    %24 = vector.load %arg11[%c2, %c0_27] : memref<18x288xf32, #tpu.memory_space<vmem>>, vector<16x288xf32>
    %c2_28 = arith.constant 2 : index
    %c0_29 = arith.constant 0 : index
    %c0_30 = arith.constant 0 : index
    %25 = vector.load %arg6[%c2_28, %c0_29, %c0_30] : memref<3x288x144xf32, #tpu.memory_space<vmem>>, vector<1x288x144xf32>
    %26 = vector.shape_cast %25 : vector<1x288x144xf32> to vector<288x144xf32>
    %cst_31 = arith.constant dense<0.000000e+00> : vector<16x144xf32>
    %27 = tpu.matmul %24, %26, %cst_31 {dimension_numbers = #tpu.dot_dimension_numbers<[1], [0], [0], [1], [0, 0, 1, 1], [], []>} : vector<16x288xf32>, vector<288x144xf32>, vector<16x144xf32> -> vector<16x144xf32>
    %28 = arith.addf %23, %27 : vector<16x144xf32>
    %c0_32 = arith.constant 0 : index
    %c0_33 = arith.constant 0 : index
    %29 = vector.load %arg8[%c0_32, %c0_33] : memref<1x144xf32, #tpu.memory_space<vmem>>, vector<1x144xf32>
    %30 = vector.broadcast %29 : vector<1x144xf32> to vector<16x144xf32>
    %31 = arith.addf %28, %30 : vector<16x144xf32>
    %cst_34 = arith.constant 0.000000e+00 : f32
    %32 = vector.broadcast %cst_34 : f32 to vector<16x144xf32>
    %33 = arith.maximumf %31, %32 : vector<16x144xf32>
    %c1_35 = arith.constant 1 : index
    %c0_36 = arith.constant 0 : index
    %34 = vector.load %arg12[%c1_35, %c0_36] : memref<18x144xf32, #tpu.memory_space<vmem>>, vector<16x144xf32>
    tpu.vector_store %arg12[%c1_35, %c0_36], %33 {strides = array<i32>} : memref<18x144xf32, #tpu.memory_space<vmem>>, vector<16x144xf32>,
    %c0_37 = arith.constant 0 : index
    %c0_38 = arith.constant 0 : index
    %35 = vector.load %arg12[%c0_37, %c0_38] : memref<18x144xf32, #tpu.memory_space<vmem>>, vector<16x144xf32>
    %c0_39 = arith.constant 0 : index
    %c0_40 = arith.constant 0 : index
    %c0_41 = arith.constant 0 : index
    %36 = vector.load %arg7[%c0_39, %c0_40, %c0_41] : memref<3x144x128xf32, #tpu.memory_space<vmem>>, vector<1x144x128xf32>
    %37 = vector.shape_cast %36 : vector<1x144x128xf32> to vector<144x128xf32>
    %cst_42 = arith.constant dense<0.000000e+00> : vector<16x128xf32>
    %38 = tpu.matmul %35, %37, %cst_42 {dimension_numbers = #tpu.dot_dimension_numbers<[1], [0], [0], [1], [0, 0, 1, 1], [], []>} : vector<16x144xf32>, vector<144x128xf32>, vector<16x128xf32> -> vector<16x128xf32>
    %c1_43 = arith.constant 1 : index
    %c0_44 = arith.constant 0 : index
    %39 = vector.load %arg12[%c1_43, %c0_44] : memref<18x144xf32, #tpu.memory_space<vmem>>, vector<16x144xf32>
    %c1_45 = arith.constant 1 : index
    %c0_46 = arith.constant 0 : index
    %c0_47 = arith.constant 0 : index
    %40 = vector.load %arg7[%c1_45, %c0_46, %c0_47] : memref<3x144x128xf32, #tpu.memory_space<vmem>>, vector<1x144x128xf32>
    %41 = vector.shape_cast %40 : vector<1x144x128xf32> to vector<144x128xf32>
    %cst_48 = arith.constant dense<0.000000e+00> : vector<16x128xf32>
    %42 = tpu.matmul %39, %41, %cst_48 {dimension_numbers = #tpu.dot_dimension_numbers<[1], [0], [0], [1], [0, 0, 1, 1], [], []>} : vector<16x144xf32>, vector<144x128xf32>, vector<16x128xf32> -> vector<16x128xf32>
    %43 = arith.addf %38, %42 : vector<16x128xf32>
    %c2_49 = arith.constant 2 : index
    %c0_50 = arith.constant 0 : index
    %44 = vector.load %arg12[%c2_49, %c0_50] : memref<18x144xf32, #tpu.memory_space<vmem>>, vector<16x144xf32>
    %c2_51 = arith.constant 2 : index
    %c0_52 = arith.constant 0 : index
    %c0_53 = arith.constant 0 : index
    %45 = vector.load %arg7[%c2_51, %c0_52, %c0_53] : memref<3x144x128xf32, #tpu.memory_space<vmem>>, vector<1x144x128xf32>
    %46 = vector.shape_cast %45 : vector<1x144x128xf32> to vector<144x128xf32>
    %cst_54 = arith.constant dense<0.000000e+00> : vector<16x128xf32>
    %47 = tpu.matmul %44, %46, %cst_54 {dimension_numbers = #tpu.dot_dimension_numbers<[1], [0], [0], [1], [0, 0, 1, 1], [], []>} : vector<16x144xf32>, vector<144x128xf32>, vector<16x128xf32> -> vector<16x128xf32>
    %48 = arith.addf %43, %47 : vector<16x128xf32>
    %c0_55 = arith.constant 0 : index
    %c0_56 = arith.constant 0 : index
    %49 = vector.load %arg9[%c0_55, %c0_56] : memref<1x128xf32, #tpu.memory_space<vmem>>, vector<1x128xf32>
    %50 = vector.broadcast %49 : vector<1x128xf32> to vector<16x128xf32>
    %51 = arith.addf %48, %50 : vector<16x128xf32>
    %cst_57 = arith.constant 0.000000e+00 : f32
    %52 = vector.broadcast %cst_57 : f32 to vector<16x128xf32>
    %53 = arith.maximumf %51, %52 : vector<16x128xf32>
    %c0_58 = arith.constant 0 : index
    %c0_59 = arith.constant 0 : index
    %c0_60 = arith.constant 0 : index
    %54 = vector.load %arg10[%c0_58, %c0_59, %c0_60] : memref<1x16x128xf32, #tpu.memory_space<vmem>>, vector<1x16x128xf32>
    %55 = vector.shape_cast %54 : vector<1x16x128xf32> to vector<16x128xf32>
    %56 = vector.shape_cast %53 : vector<16x128xf32> to vector<1x16x128xf32>
    tpu.vector_store %arg10[%c0_58, %c0_59, %c0_60], %56 {strides = array<i32>} : memref<1x16x128xf32, #tpu.memory_space<vmem>>, vector<1x16x128xf32>,
    return
  }
  func.func @transform_0(%arg0: i32) -> (i32, i32, i32) {
    %c0_i32 = arith.constant 0 : i32
    %c0_i32_0 = arith.constant 0 : i32
    %c0_i32_1 = arith.constant 0 : i32
    return %arg0, %c0_i32, %c0_i32_0 : i32, i32, i32
  }
  func.func @transform_1(%arg0: i32) -> (i32, i32, i32) {
    %c0_i32 = arith.constant 0 : i32
    %c0_i32_0 = arith.constant 0 : i32
    %c0_i32_1 = arith.constant 0 : i32
    return %arg0, %c0_i32, %c0_i32_0 : i32, i32, i32
  }
  func.func @transform_2(%arg0: i32) -> (i32, i32) {
    %c0_i32 = arith.constant 0 : i32
    %c0_i32_0 = arith.constant 0 : i32
    %c0_i32_1 = arith.constant 0 : i32
    return %c0_i32, %c0_i32_0 : i32, i32
  }
  func.func @transform_3(%arg0: i32) -> (i32, i32) {
    %c0_i32 = arith.constant 0 : i32
    %c0_i32_0 = arith.constant 0 : i32
    %c0_i32_1 = arith.constant 0 : i32
    return %c0_i32, %c0_i32_0 : i32, i32
  }
  func.func @transform_4(%arg0: i32) -> (i32, i32) {
    %c0_i32 = arith.constant 0 : i32
    %c0_i32_0 = arith.constant 0 : i32
    %c0_i32_1 = arith.constant 0 : i32
    return %c0_i32, %c0_i32_0 : i32, i32
  }
  func.func @transform_5(%arg0: i32) -> (i32, i32, i32) {
    %c0_i32 = arith.constant 0 : i32
    %c0_i32_0 = arith.constant 0 : i32
    %c0_i32_1 = arith.constant 0 : i32
    %c0_i32_2 = arith.constant 0 : i32
    return %c0_i32, %c0_i32_0, %c0_i32_1 : i32, i32, i32
  }
  func.func @transform_6(%arg0: i32) -> (i32, i32, i32) {
    %c0_i32 = arith.constant 0 : i32
    %c0_i32_0 = arith.constant 0 : i32
    %c0_i32_1 = arith.constant 0 : i32
    %c0_i32_2 = arith.constant 0 : i32
    return %c0_i32, %c0_i32_0, %c0_i32_1 : i32, i32, i32
  }
  func.func @transform_7(%arg0: i32) -> (i32, i32) {
    %c0_i32 = arith.constant 0 : i32
    %c0_i32_0 = arith.constant 0 : i32
    %c0_i32_1 = arith.constant 0 : i32
    return %c0_i32, %c0_i32_0 : i32, i32
  }
  func.func @transform_8(%arg0: i32) -> (i32, i32) {
    %c0_i32 = arith.constant 0 : i32
    %c0_i32_0 = arith.constant 0 : i32
    %c0_i32_1 = arith.constant 0 : i32
    return %c0_i32, %c0_i32_0 : i32, i32
  }
  func.func @transform_9(%arg0: i32) -> (i32, i32, i32) {
    %c0_i32 = arith.constant 0 : i32
    %c0_i32_0 = arith.constant 0 : i32
    %c0_i32_1 = arith.constant 0 : i32
    return %arg0, %c0_i32, %c0_i32_0 : i32, i32, i32
  }
}

</mosaic_0001>

<llo_original>
// kernel: tpu_custom_call.1
$region0: #{tpu_custom_call.1}
  #allocation0 [shape = 'u32[]', space=smem, size = 0x4, offset = 0x4, fixed_abs, tag = 'smem constant byte address 0x4 - core index']
  #allocation1 [shape = 'u32[144,128]{1,0:T(1,128)}', space=vmem, size = 0x12000, scoped, tag = 'internal scratch']
  #allocation2 [shape = 'f32[18,288]{1,0:T(8,128)}', space=vmem, size = 0x9000, scoped, tag = 'scratch operand']
  #allocation3 [shape = 'f32[18,144]{1,0:T(8,128)}', space=vmem, size = 0x6000, scoped, tag = 'scratch operand']
  %s0 = inlined_call_operand.vmem [shape: f32[2,8,64], index: 0, kind: input, shape index: {}]
  %s1 = inlined_call_operand.vmem [shape: f32[2,16,128], index: 1, kind: input, shape index: {}]
  %s2 = inlined_call_operand.vmem [shape: f32[16,8], index: 2, kind: input, shape index: {}]
  %s3 = inlined_call_operand.vmem [shape: f32[64,288], index: 3, kind: input, shape index: {}]
  %s4 = inlined_call_operand.vmem [shape: f32[128,288], index: 4, kind: input, shape index: {}]
  %s5 = inlined_call_operand.vmem [shape: f32[3,288,144], index: 5, kind: input, shape index: {}]
  %s6 = inlined_call_operand.vmem [shape: f32[3,144,128], index: 6, kind: input, shape index: {}]
  %s7 = inlined_call_operand.vmem [shape: f32[1,144], index: 7, kind: input, shape index: {}]
  %s8 = inlined_call_operand.vmem [shape: f32[1,128], index: 8, kind: input, shape index: {}]
  %s9 = inlined_call_operand.hbm [shape: f32[2,16,128], index: 9, kind: output, shape index: {}]
  %s10 = sld [smem:[#allocation0]]
  $region73: #{tpu_custom_call.1} parent=0
    _
  %s12 = ssub.s32 1, %s10
  %s13 = scalar_select 0, %s12, %s10
  $region1: #{tpu_custom_call.1} parent=0
    #allocation4 [shape = 'u8[16384]{0}', space=vmem, size = 0x4000, scoped, tag = 'output window, operand 0']
    #allocation5 [shape = 's32[2]{0}', space=sflag, size = 0x8, scoped, tag = 'scoped memory for tpu_custom_call.1']
    %14 = vsyncpa [#allocation5], 0
    %s15 = scalar_lea.sflag [#allocation5], 1
    %16 = vsyncpa %s15, 0
    loop: start=0, step=1, limit=4
    $region2: #{tpu_custom_call.1} parent=1 // loop_pre_header
      _
    $region3: #{tpu_custom_call.1} parent=1 // loop_header
      %s18 = sphi 0, %s22
      %p19 = scmp.ge.s32.totalorder %s18, 4
      %s28 = sphi 0, %s30
      %s31 = sphi 0, %s28
      %s32 = sphi 0, %s31
      %s48 = sphi 0, %s32
      %s54 = sphi 0, %s56
      %s57 = sphi 0, %s54
      %s58 = sphi 0, %s57
      %s74 = sphi 0, %s58
      %s78 = sphi 0, %s78
      %s80 = sphi 0, %s78
      %s81 = sphi 0, %s80
      %s95 = sphi 0, %s81
      %s99 = sphi 0, %s99
      %s101 = sphi 0, %s99
      %s102 = sphi 0, %s101
      %s116 = sphi 0, %s102
      %s120 = sphi 0, %s120
      %s122 = sphi 0, %s120
      %s123 = sphi 0, %s122
      %s137 = sphi 0, %s123
      %s141 = sphi 0, %s141
      %s143 = sphi 0, %s141
      %s144 = sphi 0, %s143
      %s158 = sphi 0, %s144
      %s162 = sphi 0, %s162
      %s164 = sphi 0, %s162
      %s165 = sphi 0, %s164
      %s179 = sphi 0, %s165
      %s183 = sphi 0, %s183
      %s185 = sphi 0, %s183
      %s186 = sphi 0, %s185
      %s200 = sphi 0, %s186
      %s204 = sphi 0, %s204
      %s206 = sphi 0, %s204
      %s207 = sphi 0, %s206
      %s221 = sphi 0, %s207
      %s227 = sphi 0, %s229
      %s230 = sphi 0, %s227
      %s231 = sphi 0, %s230
      %s247 = sphi 0, %s231
    $region4: #{tpu_custom_call.1} parent=1 // loop_header_branch
      %21 = sbr.rel (%p19) target = $region8
    $region5: #{tpu_custom_call.1} parent=1 // loop_body
      %s23 = ssub.s32 %s18, 1
      %s24 = ssub.s32 %s18, 2
      %s25 = sadd.s32 %s18, 1
      %s26 = ssub.s32 %s18, %s25
      %p27 = scmp.eq.s32.totalorder %s26, 0
      %s29 = sadd.s32 %s28, 1
      %s30 = scalar_select %p27, %s28, %s29
      %p33 = pneg %p27
      %p34 = scmp.eq.s32.totalorder %s18, 1
      %p35 = por %p33, %p34
      %p36 = scmp.ne.s32.totalorder %s28, %s31
      %p37 = scmp.eq.s32.totalorder %s18, 0
      %p38 = por %p36, %p37
      %p39 = scmp.ne.s32.totalorder %s28, %s31
      %p40 = scmp.eq.s32.totalorder %s23, 1
      %p41 = por %p39, %p40
      %p42 = scmp.ne.s32.totalorder %s31, %s32
      %p43 = scmp.eq.s32.totalorder %s23, 0
      %p44 = por %p42, %p43
      %p45 = scmp.ne.s32.totalorder %s31, %s32
      %p46 = scmp.eq.s32.totalorder %s24, 1
      %p47 = por %p45, %p46
      %p49 = scmp.ne.s32.totalorder %s32, %s48
      %p50 = scmp.eq.s32.totalorder %s24, 0
      %p51 = por %p49, %p50
      %s52 = ssub.s32 %s18, %s25
      %p53 = scmp.eq.s32.totalorder %s52, 0
      %s55 = sadd.s32 %s54, 1
      %s56 = scalar_select %p53, %s54, %s55
      %p59 = pneg %p53
      %p60 = scmp.eq.s32.totalorder %s18, 1
      %p61 = por %p59, %p60
      %p62 = scmp.ne.s32.totalorder %s54, %s57
      %p63 = scmp.eq.s32.totalorder %s18, 0
      %p64 = por %p62, %p63
      %p65 = scmp.ne.s32.totalorder %s54, %s57
      %p66 = scmp.eq.s32.totalorder %s23, 1
      %p67 = por %p65, %p66
      %p68 = scmp.ne.s32.totalorder %s57, %s58
      %p69 = scmp.eq.s32.totalorder %s23, 0
      %p70 = por %p68, %p69
      %p71 = scmp.ne.s32.totalorder %s57, %s58
      %p72 = scmp.eq.s32.totalorder %s24, 1
      %p73 = por %p71, %p72
      %p75 = scmp.ne.s32.totalorder %s58, %s74
      %p76 = scmp.eq.s32.totalorder %s24, 0
      %p77 = por %p75, %p76
      %s79 = sadd.s32 %s78, 1
      %p82 = scmp.eq.s32.totalorder %s18, 1
      %p83 = scmp.ne.s32.totalorder %s78, %s80
      %p84 = scmp.eq.s32.totalorder %s18, 0
      %p85 = por %p83, %p84
      %p86 = scmp.ne.s32.totalorder %s78, %s80
      %p87 = scmp.eq.s32.totalorder %s23, 1
      %p88 = por %p86, %p87
      %p89 = scmp.ne.s32.totalorder %s80, %s81
      %p90 = scmp.eq.s32.totalorder %s23, 0
      %p91 = por %p89, %p90
      %p92 = scmp.ne.s32.totalorder %s80, %s81
      %p93 = scmp.eq.s32.totalorder %s24, 1
      %p94 = por %p92, %p93
      %p96 = scmp.ne.s32.totalorder %s81, %s95
      %p97 = scmp.eq.s32.totalorder %s24, 0
      %p98 = por %p96, %p97
      %s100 = sadd.s32 %s99, 1
      %p103 = scmp.eq.s32.totalorder %s18, 1
      %p104 = scmp.ne.s32.totalorder %s99, %s101
      %p105 = scmp.eq.s32.totalorder %s18, 0
      %p106 = por %p104, %p105
      %p107 = scmp.ne.s32.totalorder %s99, %s101
      %p108 = scmp.eq.s32.totalorder %s23, 1
      %p109 = por %p107, %p108
      %p110 = scmp.ne.s32.totalorder %s101, %s102
      %p111 = scmp.eq.s32.totalorder %s23, 0
      %p112 = por %p110, %p111
      %p113 = scmp.ne.s32.totalorder %s101, %s102
      %p114 = scmp.eq.s32.totalorder %s24, 1
      %p115 = por %p113, %p114
      %p117 = scmp.ne.s32.totalorder %s102, %s116
      %p118 = scmp.eq.s32.totalorder %s24, 0
      %p119 = por %p117, %p118
      %s121 = sadd.s32 %s120, 1
      %p124 = scmp.eq.s32.totalorder %s18, 1
      %p125 = scmp.ne.s32.totalorder %s120, %s122
      %p126 = scmp.eq.s32.totalorder %s18, 0
      %p127 = por %p125, %p126
      %p128 = scmp.ne.s32.totalorder %s120, %s122
      %p129 = scmp.eq.s32.totalorder %s23, 1
      %p130 = por %p128, %p129
      %p131 = scmp.ne.s32.totalorder %s122, %s123
      %p132 = scmp.eq.s32.totalorder %s23, 0
      %p133 = por %p131, %p132
      %p134 = scmp.ne.s32.totalorder %s122, %s123
      %p135 = scmp.eq.s32.totalorder %s24, 1
      %p136 = por %p134, %p135
      %p138 = scmp.ne.s32.totalorder %s123, %s137
      %p139 = scmp.eq.s32.totalorder %s24, 0
      %p140 = por %p138, %p139
      %s142 = sadd.s32 %s141, 1
      %p145 = scmp.eq.s32.totalorder %s18, 1
      %p146 = scmp.ne.s32.totalorder %s141, %s143
      %p147 = scmp.eq.s32.totalorder %s18, 0
      %p148 = por %p146, %p147
      %p149 = scmp.ne.s32.totalorder %s141, %s143
      %p150 = scmp.eq.s32.totalorder %s23, 1
      %p151 = por %p149, %p150
      %p152 = scmp.ne.s32.totalorder %s143, %s144
      %p153 = scmp.eq.s32.totalorder %s23, 0
      %p154 = por %p152, %p153
      %p155 = scmp.ne.s32.totalorder %s143, %s144
      %p156 = scmp.eq.s32.totalorder %s24, 1
      %p157 = por %p155, %p156
      %p159 = scmp.ne.s32.totalorder %s144, %s158
      %p160 = scmp.eq.s32.totalorder %s24, 0
      %p161 = por %p159, %p160
      %s163 = sadd.s32 %s162, 1
      %p166 = scmp.eq.s32.totalorder %s18, 1
      %p167 = scmp.ne.s32.totalorder %s162, %s164
      %p168 = scmp.eq.s32.totalorder %s18, 0
      %p169 = por %p167, %p168
      %p170 = scmp.ne.s32.totalorder %s162, %s164
      %p171 = scmp.eq.s32.totalorder %s23, 1
      %p172 = por %p170, %p171
      %p173 = scmp.ne.s32.totalorder %s164, %s165
      %p174 = scmp.eq.s32.totalorder %s23, 0
      %p175 = por %p173, %p174
      %p176 = scmp.ne.s32.totalorder %s164, %s165
      %p177 = scmp.eq.s32.totalorder %s24, 1
      %p178 = por %p176, %p177
      %p180 = scmp.ne.s32.totalorder %s165, %s179
      %p181 = scmp.eq.s32.totalorder %s24, 0
      %p182 = por %p180, %p181
      %s184 = sadd.s32 %s183, 1
      %p187 = scmp.eq.s32.totalorder %s18, 1
      %p188 = scmp.ne.s32.totalorder %s183, %s185
      %p189 = scmp.eq.s32.totalorder %s18, 0
      %p190 = por %p188, %p189
      %p191 = scmp.ne.s32.totalorder %s183, %s185
      %p192 = scmp.eq.s32.totalorder %s23, 1
      %p193 = por %p191, %p192
      %p194 = scmp.ne.s32.totalorder %s185, %s186
      %p195 = scmp.eq.s32.totalorder %s23, 0
      %p196 = por %p194, %p195
      %p197 = scmp.ne.s32.totalorder %s185, %s186
      %p198 = scmp.eq.s32.totalorder %s24, 1
      %p199 = por %p197, %p198
      %p201 = scmp.ne.s32.totalorder %s186, %s200
      %p202 = scmp.eq.s32.totalorder %s24, 0
      %p203 = por %p201, %p202
      %s205 = sadd.s32 %s204, 1
      %p208 = scmp.eq.s32.totalorder %s18, 1
      %p209 = scmp.ne.s32.totalorder %s204, %s206
      %p210 = scmp.eq.s32.totalorder %s18, 0
      %p211 = por %p209, %p210
      %p212 = scmp.ne.s32.totalorder %s204, %s206
      %p213 = scmp.eq.s32.totalorder %s23, 1
      %p214 = por %p212, %p213
      %p215 = scmp.ne.s32.totalorder %s206, %s207
      %p216 = scmp.eq.s32.totalorder %s23, 0
      %p217 = por %p215, %p216
      %p218 = scmp.ne.s32.totalorder %s206, %s207
      %p219 = scmp.eq.s32.totalorder %s24, 1
      %p220 = por %p218, %p219
      %p222 = scmp.ne.s32.totalorder %s207, %s221
      %p223 = scmp.eq.s32.totalorder %s24, 0
      %p224 = por %p222, %p223
      %s225 = ssub.s32 %s18, %s25
      %p226 = scmp.eq.s32.totalorder %s225, 0
      %s228 = sadd.s32 %s227, 1
      %s229 = scalar_select %p226, %s227, %s228
      %p232 = pneg %p226
      %p233 = scmp.eq.s32.totalorder %s18, 1
      %p234 = por %p232, %p233
      %p235 = scmp.ne.s32.totalorder %s227, %s230
      %p236 = scmp.eq.s32.totalorder %s18, 0
      %p237 = por %p235, %p236
      %p238 = scmp.ne.s32.totalorder %s227, %s230
      %p239 = scmp.eq.s32.totalorder %s23, 1
      %p240 = por %p238, %p239
      %p241 = scmp.ne.s32.totalorder %s230, %s231
      %p242 = scmp.eq.s32.totalorder %s23, 0
      %p243 = por %p241, %p242
      %p244 = scmp.ne.s32.totalorder %s230, %s231
      %p245 = scmp.eq.s32.totalorder %s24, 1
      %p246 = por %p244, %p245
      %p248 = scmp.ne.s32.totalorder %s231, %s247
      %p249 = scmp.eq.s32.totalorder %s24, 0
      %p250 = por %p248, %p249
      %p251 = scmp.le.s32.totalorder 1, %s18
      %p252 = scmp.lt.s32.totalorder %s18, 3
      %p253 = pnand %p251, %p252
      %p254 = pneg %p253
      // Predicated region
      $region9: #{tpu_custom_call.1} parent=5 // pred_check
        _
      $region10: #{tpu_custom_call.1} parent=5 // pred_check_branch
        %256 = sbr.rel (%p253) target = $region12
      $region11: #{tpu_custom_call.1} parent=5 // pred_region
        %s257 = ssub.s32 %s18, 1
        // Predicated region
        $region13: #{tpu_custom_call.1} parent=11 // pred_check
          %p258 = pneg %p91
        $region14: #{tpu_custom_call.1} parent=11 // pred_check_branch
          %260 = sbr.rel (%p258) target = $region16
        $region15: #{tpu_custom_call.1} parent=11 // pred_region
          _
        $region16: #{tpu_custom_call.1} parent=11 // pred_fallthru
          _
        // Predicated region
        $region17: #{tpu_custom_call.1} parent=11 // pred_check
          %p261 = pneg %p112
        $region18: #{tpu_custom_call.1} parent=11 // pred_check_branch
          %263 = sbr.rel (%p261) target = $region20
        $region19: #{tpu_custom_call.1} parent=11 // pred_region
          _
        $region20: #{tpu_custom_call.1} parent=11 // pred_fallthru
          _
        // Predicated region
        $region21: #{tpu_custom_call.1} parent=11 // pred_check
          %p264 = pneg %p133
        $region22: #{tpu_custom_call.1} parent=11 // pred_check_branch
          %266 = sbr.rel (%p264) target = $region24
        $region23: #{tpu_custom_call.1} parent=11 // pred_region
          _
        $region24: #{tpu_custom_call.1} parent=11 // pred_fallthru
          _
        // Predicated region
        $region25: #{tpu_custom_call.1} parent=11 // pred_check
          %p267 = pneg %p154
        $region26: #{tpu_custom_call.1} parent=11 // pred_check_branch
          %269 = sbr.rel (%p267) target = $region28
        $region27: #{tpu_custom_call.1} parent=11 // pred_region
          _
        $region28: #{tpu_custom_call.1} parent=11 // pred_fallthru
          _
        // Predicated region
        $region29: #{tpu_custom_call.1} parent=11 // pred_check
          %p270 = pneg %p175
        $region30: #{tpu_custom_call.1} parent=11 // pred_check_branch
          %272 = sbr.rel (%p270) target = $region32
        $region31: #{tpu_custom_call.1} parent=11 // pred_region
          _
        $region32: #{tpu_custom_call.1} parent=11 // pred_fallthru
          _
        // Predicated region
        $region33: #{tpu_custom_call.1} parent=11 // pred_check
          %p273 = pneg %p196
        $region34: #{tpu_custom_call.1} parent=11 // pred_check_branch
          %275 = sbr.rel (%p273) target = $region36
        $region35: #{tpu_custom_call.1} parent=11 // pred_region
          _
        $region36: #{tpu_custom_call.1} parent=11 // pred_fallthru
          _
        // Predicated region
        $region37: #{tpu_custom_call.1} parent=11 // pred_check
          %p276 = pneg %p217
        $region38: #{tpu_custom_call.1} parent=11 // pred_check_branch
          %278 = sbr.rel (%p276) target = $region40
        $region39: #{tpu_custom_call.1} parent=11 // pred_region
          _
        $region40: #{tpu_custom_call.1} parent=11 // pred_fallthru
          _
      $region12: #{tpu_custom_call.1} parent=5 // pred_fallthru
        _
      %p279 = scmp.lt.s32.totalorder %s18, 2
      // Predicated region
      $region41: #{tpu_custom_call.1} parent=5 // pred_check
        %p280 = pneg %p279
      $region42: #{tpu_custom_call.1} parent=5 // pred_check_branch
        %282 = sbr.rel (%p280) target = $region44
      $region43: #{tpu_custom_call.1} parent=5 // pred_region
        // Predicated region
        $region45: #{tpu_custom_call.1} parent=43 // pred_check
          %p283 = pneg %p38
        $region46: #{tpu_custom_call.1} parent=43 // pred_check_branch
          %285 = sbr.rel (%p283) target = $region48
        $region47: #{tpu_custom_call.1} parent=43 // pred_region
          %p286 = scmp.lt.s32.totalorder %s18, 1
          %s287 = scalar_select %p286, %s18, 1
          %s288 = smul.addr %s287, 8
          %s289 = scalar_lea.vmem %s0, %s288
        $region48: #{tpu_custom_call.1} parent=43 // pred_fallthru
          _
        // Predicated region
        $region49: #{tpu_custom_call.1} parent=43 // pred_check
          %p290 = pneg %p64
        $region50: #{tpu_custom_call.1} parent=43 // pred_check_branch
          %292 = sbr.rel (%p290) target = $region52
        $region51: #{tpu_custom_call.1} parent=43 // pred_region
          %p293 = scmp.lt.s32.totalorder %s18, 1
          %s294 = scalar_select %p293, %s18, 1
          %s295 = smul.addr %s294, 2
          %s296 = smul.addr %s295, 8
          %s297 = scalar_lea.vmem %s1, %s296
        $region52: #{tpu_custom_call.1} parent=43 // pred_fallthru
          _
      $region44: #{tpu_custom_call.1} parent=5 // pred_fallthru
        _
      %p298 = scmp.le.s32.totalorder 1, %s18
      %p299 = scmp.lt.s32.totalorder %s18, 3
      %p300 = pnand %p298, %p299
      %p301 = pneg %p300
      // Predicated region
      $region53: #{tpu_custom_call.1} parent=5 // pred_check
        _
      $region54: #{tpu_custom_call.1} parent=5 // pred_check_branch
        %303 = sbr.rel (%p300) target = $region56
      $region55: #{tpu_custom_call.1} parent=5 // pred_region
        %s304 = ssub.s32 %s18, 1
        %p305 = scmp.lt.s32.totalorder %s23, 1
        %s306 = scalar_select %p305, %s23, 1
        %s307 = smul.addr %s306, 8
        %s308 = scalar_lea.vmem %s0, %s307
        %p309 = pneg %p44
        %p310 = pneg %p41
        %p311 = scmp.lt.s32.totalorder %s23, 1
        %s312 = scalar_select %p311, %s23, 1
        %s313 = smul.addr %s312, 2
        %s314 = smul.addr %s313, 8
        %s315 = scalar_lea.vmem %s1, %s314
        %p316 = pneg %p70
        %p317 = pneg %p67
        %p318 = pneg %p91
        %p319 = pneg %p88
        %p320 = pneg %p112
        %p321 = pneg %p109
        %p322 = pneg %p133
        %p323 = pneg %p130
        %p324 = pneg %p154
        %p325 = pneg %p151
        %p326 = pneg %p175
        %p327 = pneg %p172
        %p328 = pneg %p196
        %p329 = pneg %p193
        %p330 = pneg %p217
        %p331 = pneg %p214
        %p332 = pneg %p243
        %p333 = pneg %p240
        %s334 = sand.u32 %s230, 1
        %s335 = scalar_lea.sflag [#allocation5], %s334
        %s336 = sand.u32 %s230, 1
        %s337 = smul.addr %s336, 16
        %s338 = scalar_lea.vmem [#allocation4], %s337
        %p339 = scmp.lt.s32.totalorder %s23, 1
        %s340 = scalar_select %p339, %s23, 1
        %s341 = smul.addr %s340, 8
        %s342 = scalar_lea.vmem %s0, %s341
        %p343 = scmp.lt.s32.totalorder %s23, 1
        %s344 = scalar_select %p343, %s23, 1
        %s345 = smul.addr %s344, 2
        %s346 = smul.addr %s345, 8
        %s347 = scalar_lea.vmem %s1, %s346
        %p348 = scmp.eq.s32.totalorder %s23, 0
        // Predicated region
        $region57: #{tpu_custom_call.1} parent=55 // pred_check
          %p349 = pneg %p348
        $region58: #{tpu_custom_call.1} parent=55 // pred_check_branch
          %351 = sbr.rel (%p349) target = $region60
        $region59: #{tpu_custom_call.1} parent=55 // pred_region
          %v352 = vlaneseq
          %vm353 = vcmp.ge.s32.totalorder %v352, 0
          %vm354 = vcmp.lt.s32.totalorder %v352, 288
          %vm355 = vmand %vm353, %vm354
          %356 = vst.msk [vmem:[#allocation2] ss:$8 sm:$0x7] %vm355, 0.0
          %357 = vst.msk [vmem:[#allocation2] ss:$8 sm:$0x0] %vm355, 0.0
          %s358 = scalar_lea.vmem [#allocation2], 49
          %359 = vst.msk [vmem:[%s358] ss:$8 sm:$0x7] %vm355, 0.0
          %360 = vst.msk [vmem:[%s358] ss:$8 sm:$0x0] %vm355, 0.0
          %vm361 = vcmp.lt.s32.totalorder %v352, 144
          %vm362 = vmand %vm353, %vm361
          %363 = vst.msk [vmem:[#allocation3] ss:$8 sm:$0x3] %vm362, 0.0
          %364 = vst.msk [vmem:[#allocation3] ss:$8 sm:$0x0] %vm362, 0.0
          %s365 = scalar_lea.vmem [#allocation3], 33
          %366 = vst.msk [vmem:[%s365] ss:$8 sm:$0x3] %vm362, 0.0
          %367 = vst.msk [vmem:[%s365] ss:$8 sm:$0x0] %vm362, 0.0
        $region60: #{tpu_custom_call.1} parent=55 // pred_fallthru
          _
        %v368 = vld [vmem:[%s2] sm:$0xff]
        %v369 = vld [vmem:[%s2 + $0x8] sm:$0xff]
        %v370 = vld [vmem:[%s342] sm:$0xff]
        %vm371 = vcmask 64512
        %v373 = vsel %vm371, %v368, 0
        %v376 = vsel %vm371, %v369, 0
        %378 = vmatprep.subr.mxu0 0.0
        %379 = vmatpush1.msra.mxu0 %v370
        %380 = vmatprep.subr.mxu0 0.0
        %381 = vmatpush1.msra.mxu0 0.0
        %382 = vmatprep.subr.mxu0 0.0
        %383 = vmatpush1.msra.mxu0 0.0
        %384 = vmatprep.subr.mxu0 0.0
        %385 = vmatpush1.msra.mxu0 0.0
        %386 = vmatprep.subr.mxu0 0.0
        %387 = vmatpush1.msra.mxu0 0.0
        %388 = vmatprep.subr.mxu0 0.0
        %389 = vmatpush1.msra.mxu0 0.0
        %390 = vmatprep.subr.mxu0 0.0
        %391 = vmatpush1.msra.mxu0 0.0
        %392 = vmatprep.subr.mxu0 0.0
        %393 = vmatpush1.msra.mxu0 0.0
        %394 = vmatprep.subr.mxu0 0.0
        %395 = vmatpush1.msra.mxu0 0.0
        %396 = vmatprep.subr.mxu0 0.0
        %397 = vmatpush1.msra.mxu0 0.0
        %398 = vmatprep.subr.mxu0 0.0
        %399 = vmatpush1.msra.mxu0 0.0
        %400 = vmatprep.subr.mxu0 0.0
        %401 = vmatpush1.msra.mxu0 0.0
        %402 = vmatprep.subr.mxu0 0.0
        %403 = vmatpush1.msra.mxu0 0.0
        %404 = vmatprep.subr.mxu0 0.0
        %405 = vmatpush1.msra.mxu0 0.0
        %406 = vmatprep.subr.mxu0 0.0
        %407 = vmatpush1.msra.mxu0 0.0
        %408 = vmatprep.subr.mxu0 0.0
        %409 = vmatpush1.msra.mxu0 0.0
        %410 = vmatprep.subr.mxu0 0.0
        %411 = vmatpush1.msra.mxu0 0.0
        %412 = vmatprep.subr.mxu0 0.0
        %413 = vmatpush1.msra.mxu0 0.0
        %414 = vmatprep.subr.mxu0 0.0
        %415 = vmatpush1.msra.mxu0 0.0
        %416 = vmatprep.subr.mxu0 0.0
        %417 = vmatpush1.msra.mxu0 0.0
        %418 = vmatprep.subr.mxu0 0.0
        %419 = vmatpush1.msra.mxu0 0.0
        %420 = vmatprep.subr.mxu0 0.0
        %421 = vmatpush1.msra.mxu0 0.0
        %422 = vmatprep.subr.mxu0 0.0
        %423 = vmatpush1.msra.mxu0 0.0
        %424 = vmatprep.subr.mxu0 0.0
        %425 = vmatpush1.msra.mxu0 0.0
        %426 = vmatprep.subr.mxu0 0.0
        %427 = vmatpush1.msra.mxu0 0.0
        %428 = vmatprep.subr.mxu0 0.0
        %429 = vmatpush1.msra.mxu0 0.0
        %430 = vmatprep.subr.mxu0 0.0
        %431 = vmatpush1.msra.mxu0 0.0
        %432 = vmatprep.subr.mxu0 0.0
        %433 = vmatpush1.msra.mxu0 0.0
        %434 = vmatprep.subr.mxu0 0.0
        %435 = vmatpush1.msra.mxu0 0.0
        %436 = vmatprep.subr.mxu0 0.0
        %437 = vmatpush1.msra.mxu0 0.0
        %438 = vmatprep.subr.mxu0 0.0
        %439 = vmatpush1.msra.mxu0 0.0
        %440 = vmatprep.subr.mxu0 0.0
        %441 = vmatpush1.msra.mxu0 0.0
        %442 = vmatprep.mubr.f32.mxu0 0.0
        %443 = vmatmul.mubr.f32.gmra.mrb[0].mxu0 %v373
        %v444 = vpop.f32.mrb[0].mxu0
        %v445 = vadd.f32 0.0, %v444
        %v446 = vpop.f32.mrb[0].mxu0
        %447 = vmatprep.mubr.f32.mxu0 0.0
        %448 = vmatmul.mubr.f32.gmra.mrb[0].mxu0 %v376
        %v449 = vpop.f32.mrb[0].mxu0
        %v450 = vadd.f32 0.0, %v449
        %v451 = vpop.f32.mrb[0].mxu0
        %452 = vdwg.mxu0
        %v453 = vld [vmem:[%s3] sm:$0xff]
        %v454 = vld [vmem:[%s3 + $0x8] sm:$0xff]
        %v455 = vld [vmem:[%s3 + $0x10] sm:$0xff]
        %v456 = vld [vmem:[%s3 + $0x18] sm:$0xff]
        %v457 = vld [vmem:[%s3 + $0x20] sm:$0xff]
        %v458 = vld [vmem:[%s3 + $0x28] sm:$0xff]
        %v459 = vld [vmem:[%s3 + $0x30] sm:$0xff]
        %v460 = vld [vmem:[%s3 + $0x38] sm:$0xff]
        %v461 = vld [vmem:[%s3 + $0x40] sm:$0xff]
        %v462 = vld [vmem:[%s3 + $0x48] sm:$0xff]
        %v463 = vld [vmem:[%s3 + $0x50] sm:$0xff]
        %v464 = vld [vmem:[%s3 + $0x58] sm:$0xff]
        %v465 = vld [vmem:[%s3 + $0x60] sm:$0xff]
        %v466 = vld [vmem:[%s3 + $0x68] sm:$0xff]
        %v467 = vld [vmem:[%s3 + $0x70] sm:$0xff]
        %v468 = vld [vmem:[%s3 + $0x78] sm:$0xff]
        %v469 = vld [vmem:[%s3 + $0x80] sm:$0xff]
        %v470 = vld [vmem:[%s3 + $0x88] sm:$0xff]
        %v471 = vld [vmem:[%s3 + $0x90] sm:$0xff]
        %v472 = vld [vmem:[%s3 + $0x98] sm:$0xff]
        %v473 = vld [vmem:[%s3 + $0xa0] sm:$0xff]
        %v474 = vld [vmem:[%s3 + $0xa8] sm:$0xff]
        %v475 = vld [vmem:[%s3 + $0xb0] sm:$0xff]
        %v476 = vld [vmem:[%s3 + $0xb8] sm:$0xff]
        %v477 = vld [vmem:[%s347] sm:$0xff]
        %v478 = vld [vmem:[%s347 + $0x8] sm:$0xff]
        %v479 = vld [vmem:[%s4] sm:$0xff]
        %v480 = vld [vmem:[%s4 + $0x8] sm:$0xff]
        %v481 = vld [vmem:[%s4 + $0x10] sm:$0xff]
        %v482 = vld [vmem:[%s4 + $0x18] sm:$0xff]
        %v483 = vld [vmem:[%s4 + $0x20] sm:$0xff]
        %v484 = vld [vmem:[%s4 + $0x28] sm:$0xff]
        %v485 = vld [vmem:[%s4 + $0x30] sm:$0xff]
        %v486 = vld [vmem:[%s4 + $0x38] sm:$0xff]
        %v487 = vld [vmem:[%s4 + $0x40] sm:$0xff]
        %v488 = vld [vmem:[%s4 + $0x48] sm:$0xff]
        %v489 = vld [vmem:[%s4 + $0x50] sm:$0xff]
        %v490 = vld [vmem:[%s4 + $0x58] sm:$0xff]
        %v491 = vld [vmem:[%s4 + $0x60] sm:$0xff]
        %v492 = vld [vmem:[%s4 + $0x68] sm:$0xff]
        %v493 = vld [vmem:[%s4 + $0x70] sm:$0xff]
        %v494 = vld [vmem:[%s4 + $0x78] sm:$0xff]
        %v495 = vld [vmem:[%s4 + $0x80] sm:$0xff]
        %v496 = vld [vmem:[%s4 + $0x88] sm:$0xff]
        %v497 = vld [vmem:[%s4 + $0x90] sm:$0xff]
        %v498 = vld [vmem:[%s4 + $0x98] sm:$0xff]
        %v499 = vld [vmem:[%s4 + $0xa0] sm:$0xff]
        %v500 = vld [vmem:[%s4 + $0xa8] sm:$0xff]
        %v501 = vld [vmem:[%s4 + $0xb0] sm:$0xff]
        %v502 = vld [vmem:[%s4 + $0xb8] sm:$0xff]
        %v503 = vld [vmem:[%s4 + $0xc0] sm:$0xff]
        %v504 = vld [vmem:[%s4 + $0xc8] sm:$0xff]
        %v505 = vld [vmem:[%s4 + $0xd0] sm:$0xff]
        %v506 = vld [vmem:[%s4 + $0xd8] sm:$0xff]
        %v507 = vld [vmem:[%s4 + $0xe0] sm:$0xff]
        %v508 = vld [vmem:[%s4 + $0xe8] sm:$0xff]
        %v509 = vld [vmem:[%s4 + $0xf0] sm:$0xff]
        %v510 = vld [vmem:[%s4 + $0xf8] sm:$0xff]
        %v511 = vld [vmem:[%s4 + $0x100] sm:$0xff]
        %v512 = vld [vmem:[%s4 + $0x108] sm:$0xff]
        %v513 = vld [vmem:[%s4 + $0x110] sm:$0xff]
        %v514 = vld [vmem:[%s4 + $0x118] sm:$0xff]
        %v515 = vld [vmem:[%s4 + $0x120] sm:$0xff]
        %v516 = vld [vmem:[%s4 + $0x128] sm:$0xff]
        %v517 = vld [vmem:[%s4 + $0x130] sm:$0xff]
        %v518 = vld [vmem:[%s4 + $0x138] sm:$0xff]
        %v519 = vld [vmem:[%s4 + $0x140] sm:$0xff]
        %v520 = vld [vmem:[%s4 + $0x148] sm:$0xff]
        %v521 = vld [vmem:[%s4 + $0x150] sm:$0xff]
        %v522 = vld [vmem:[%s4 + $0x158] sm:$0xff]
        %v523 = vld [vmem:[%s4 + $0x160] sm:$0xff]
        %v524 = vld [vmem:[%s4 + $0x168] sm:$0xff]
        %v525 = vld [vmem:[%s4 + $0x170] sm:$0xff]
        %v526 = vld [vmem:[%s4 + $0x178] sm:$0xff]
        %527 = vmatprep.subr.mxu0 %v480
        %528 = vmatpush1.msra.mxu0 %v479
        %529 = vmatprep.subr.mxu0 %v483
        %530 = vmatpush1.msra.mxu0 %v482
        %531 = vmatprep.subr.mxu0 %v486
        %532 = vmatpush1.msra.mxu0 %v485
        %533 = vmatprep.subr.mxu0 %v489
        %534 = vmatpush1.msra.mxu0 %v488
        %535 = vmatprep.subr.mxu0 %v492
        %536 = vmatpush1.msra.mxu0 %v491
        %537 = vmatprep.subr.mxu0 %v495
        %538 = vmatpush1.msra.mxu0 %v494
        %539 = vmatprep.subr.mxu0 %v498
        %540 = vmatpush1.msra.mxu0 %v497
        %541 = vmatprep.subr.mxu0 %v501
        %542 = vmatpush1.msra.mxu0 %v500
        %543 = vmatprep.subr.mxu0 %v504
        %544 = vmatpush1.msra.mxu0 %v503
        %545 = vmatprep.subr.mxu0 %v507
        %546 = vmatpush1.msra.mxu0 %v506
        %547 = vmatprep.subr.mxu0 %v510
        %548 = vmatpush1.msra.mxu0 %v509
        %549 = vmatprep.subr.mxu0 %v513
        %550 = vmatpush1.msra.mxu0 %v512
        %551 = vmatprep.subr.mxu0 %v516
        %552 = vmatpush1.msra.mxu0 %v515
        %553 = vmatprep.subr.mxu0 %v519
        %554 = vmatpush1.msra.mxu0 %v518
        %555 = vmatprep.subr.mxu0 %v522
        %556 = vmatpush1.msra.mxu0 %v521
        %557 = vmatprep.subr.mxu0 %v525
        %558 = vmatpush1.msra.mxu0 %v524
        %559 = vmatprep.subr.mxu0 0.0
        %560 = vmatpush1.msra.mxu0 0.0
        %561 = vmatprep.subr.mxu0 0.0
        %562 = vmatpush1.msra.mxu0 0.0
        %563 = vmatprep.subr.mxu0 0.0
        %564 = vmatpush1.msra.mxu0 0.0
        %565 = vmatprep.subr.mxu0 0.0
        %566 = vmatpush1.msra.mxu0 0.0
        %567 = vmatprep.subr.mxu0 0.0
        %568 = vmatpush1.msra.mxu0 0.0
        %569 = vmatprep.subr.mxu0 0.0
        %570 = vmatpush1.msra.mxu0 0.0
        %571 = vmatprep.subr.mxu0 0.0
        %572 = vmatpush1.msra.mxu0 0.0
        %573 = vmatprep.subr.mxu0 0.0
        %574 = vmatpush1.msra.mxu0 0.0
        %575 = vmatprep.subr.mxu0 0.0
        %576 = vmatpush1.msra.mxu0 0.0
        %577 = vmatprep.subr.mxu0 0.0
        %578 = vmatpush1.msra.mxu0 0.0
        %579 = vmatprep.subr.mxu0 0.0
        %580 = vmatpush1.msra.mxu0 0.0
        %581 = vmatprep.subr.mxu0 0.0
        %582 = vmatpush1.msra.mxu0 0.0
        %583 = vmatprep.subr.mxu0 0.0
        %584 = vmatpush1.msra.mxu0 0.0
        %585 = vmatprep.subr.mxu0 0.0
        %586 = vmatpush1.msra.mxu0 0.0
        %587 = vmatprep.subr.mxu0 0.0
        %588 = vmatpush1.msra.mxu0 0.0
        %589 = vmatprep.subr.mxu0 0.0
        %590 = vmatpush1.msra.mxu0 0.0
        %591 = vmatprep.mubr.f32.mxu0 0.0
        %592 = vmatmul.mubr.f32.gmra.mrb[0].mxu0 %v477
        %v593 = vpop.f32.mrb[0].mxu0
        %v594 = vadd.f32 0.0, %v593
        %v595 = vpop.f32.mrb[0].mxu0
        %v596 = vadd.f32 0.0, %v595
        %597 = vmatprep.mubr.f32.mxu0 0.0
        %598 = vmatmul.mubr.f32.gmra.mrb[0].mxu0 %v478
        %v599 = vpop.f32.mrb[0].mxu0
        %v600 = vadd.f32 0.0, %v599
        %v601 = vpop.f32.mrb[0].mxu0
        %v602 = vadd.f32 0.0, %v601
        %603 = vdwg.mxu0
        %604 = vmatprep.subr.mxu0 0.0
        %605 = vmatpush1.msra.mxu0 %v481
        %606 = vmatprep.subr.mxu0 0.0
        %607 = vmatpush1.msra.mxu0 %v484
        %608 = vmatprep.subr.mxu0 0.0
        %609 = vmatpush1.msra.mxu0 %v487
        %610 = vmatprep.subr.mxu0 0.0
        %611 = vmatpush1.msra.mxu0 %v490
        %612 = vmatprep.subr.mxu0 0.0
        %613 = vmatpush1.msra.mxu0 %v493
        %614 = vmatprep.subr.mxu0 0.0
        %615 = vmatpush1.msra.mxu0 %v496
        %616 = vmatprep.subr.mxu0 0.0
        %617 = vmatpush1.msra.mxu0 %v499
        %618 = vmatprep.subr.mxu0 0.0
        %619 = vmatpush1.msra.mxu0 %v502
        %620 = vmatprep.subr.mxu0 0.0
        %621 = vmatpush1.msra.mxu0 %v505
        %622 = vmatprep.subr.mxu0 0.0
        %623 = vmatpush1.msra.mxu0 %v508
        %624 = vmatprep.subr.mxu0 0.0
        %625 = vmatpush1.msra.mxu0 %v511
        %626 = vmatprep.subr.mxu0 0.0
        %627 = vmatpush1.msra.mxu0 %v514
        %628 = vmatprep.subr.mxu0 0.0
        %629 = vmatpush1.msra.mxu0 %v517
        %630 = vmatprep.subr.mxu0 0.0
        %631 = vmatpush1.msra.mxu0 %v520
        %632 = vmatprep.subr.mxu0 0.0
        %633 = vmatpush1.msra.mxu0 %v523
        %634 = vmatprep.subr.mxu0 0.0
        %635 = vmatpush1.msra.mxu0 %v526
        %636 = vmatprep.subr.mxu0 0.0
        %637 = vmatpush1.msra.mxu0 0.0
        %638 = vmatprep.subr.mxu0 0.0
        %639 = vmatpush1.msra.mxu0 0.0
        %640 = vmatprep.subr.mxu0 0.0
        %641 = vmatpush1.msra.mxu0 0.0
        %642 = vmatprep.subr.mxu0 0.0
        %643 = vmatpush1.msra.mxu0 0.0
        %644 = vmatprep.subr.mxu0 0.0
        %645 = vmatpush1.msra.mxu0 0.0
        %646 = vmatprep.subr.mxu0 0.0
        %647 = vmatpush1.msra.mxu0 0.0
        %648 = vmatprep.subr.mxu0 0.0
        %649 = vmatpush1.msra.mxu0 0.0
        %650 = vmatprep.subr.mxu0 0.0
        %651 = vmatpush1.msra.mxu0 0.0
        %652 = vmatprep.subr.mxu0 0.0
        %653 = vmatpush1.msra.mxu0 0.0
        %654 = vmatprep.subr.mxu0 0.0
        %655 = vmatpush1.msra.mxu0 0.0
        %656 = vmatprep.subr.mxu0 0.0
        %657 = vmatpush1.msra.mxu0 0.0
        %658 = vmatprep.subr.mxu0 0.0
        %659 = vmatpush1.msra.mxu0 0.0
        %660 = vmatprep.subr.mxu0 0.0
        %661 = vmatpush1.msra.mxu0 0.0
        %662 = vmatprep.subr.mxu0 0.0
        %663 = vmatpush1.msra.mxu0 0.0
        %664 = vmatprep.subr.mxu0 0.0
        %665 = vmatpush1.msra.mxu0 0.0
        %666 = vmatprep.subr.mxu0 0.0
        %667 = vmatpush1.msra.mxu0 0.0
        %668 = vmatprep.mubr.f32.mxu0 0.0
        %669 = vmatmul.mubr.f32.gmra.mrb[0].mxu0 %v477
        %v670 = vpop.f32.mrb[0].mxu0
        %v671 = vadd.f32 0.0, %v670
        %v672 = vpop.f32.mrb[0].mxu0
        %673 = vmatprep.mubr.f32.mxu0 0.0
        %674 = vmatmul.mubr.f32.gmra.mrb[0].mxu0 %v478
        %v675 = vpop.f32.mrb[0].mxu0
        %v676 = vadd.f32 0.0, %v675
        %v677 = vpop.f32.mrb[0].mxu0
        %678 = vdwg.mxu0
        %vm679 = vcmask 523264
        %v681 = vsel %vm679, %v445, 0
        %v684 = vsel %vm679, %v450, 0
        %686 = vmatprep.subr.mxu0 %v454
        %687 = vmatpush1.msra.mxu0 %v453
        %688 = vmatprep.subr.mxu0 %v457
        %689 = vmatpush1.msra.mxu0 %v456
        %690 = vmatprep.subr.mxu0 %v460
        %691 = vmatpush1.msra.mxu0 %v459
        %692 = vmatprep.subr.mxu0 %v463
        %693 = vmatpush1.msra.mxu0 %v462
        %694 = vmatprep.subr.mxu0 %v466
        %695 = vmatpush1.msra.mxu0 %v465
        %696 = vmatprep.subr.mxu0 %v469
        %697 = vmatpush1.msra.mxu0 %v468
        %698 = vmatprep.subr.mxu0 %v472
        %699 = vmatpush1.msra.mxu0 %v471
        %700 = vmatprep.subr.mxu0 %v475
        %701 = vmatpush1.msra.mxu0 %v474
        %702 = vmatprep.subr.mxu0 0.0
        %703 = vmatpush1.msra.mxu0 0.0
        %704 = vmatprep.subr.mxu0 0.0
        %705 = vmatpush1.msra.mxu0 0.0
        %706 = vmatprep.subr.mxu0 0.0
        %707 = vmatpush1.msra.mxu0 0.0
        %708 = vmatprep.subr.mxu0 0.0
        %709 = vmatpush1.msra.mxu0 0.0
        %710 = vmatprep.subr.mxu0 0.0
        %711 = vmatpush1.msra.mxu0 0.0
        %712 = vmatprep.subr.mxu0 0.0
        %713 = vmatpush1.msra.mxu0 0.0
        %714 = vmatprep.subr.mxu0 0.0
        %715 = vmatpush1.msra.mxu0 0.0
        %716 = vmatprep.subr.mxu0 0.0
        %717 = vmatpush1.msra.mxu0 0.0
        %718 = vmatprep.subr.mxu0 0.0
        %719 = vmatpush1.msra.mxu0 0.0
        %720 = vmatprep.subr.mxu0 0.0
        %721 = vmatpush1.msra.mxu0 0.0
        %722 = vmatprep.subr.mxu0 0.0
        %723 = vmatpush1.msra.mxu0 0.0
        %724 = vmatprep.subr.mxu0 0.0
        %725 = vmatpush1.msra.mxu0 0.0
        %726 = vmatprep.subr.mxu0 0.0
        %727 = vmatpush1.msra.mxu0 0.0
        %728 = vmatprep.subr.mxu0 0.0
        %729 = vmatpush1.msra.mxu0 0.0
        %730 = vmatprep.subr.mxu0 0.0
        %731 = vmatpush1.msra.mxu0 0.0
        %732 = vmatprep.subr.mxu0 0.0
        %733 = vmatpush1.msra.mxu0 0.0
        %734 = vmatprep.subr.mxu0 0.0
        %735 = vmatpush1.msra.mxu0 0.0
        %736 = vmatprep.subr.mxu0 0.0
        %737 = vmatpush1.msra.mxu0 0.0
        %738 = vmatprep.subr.mxu0 0.0
        %739 = vmatpush1.msra.mxu0 0.0
        %740 = vmatprep.subr.mxu0 0.0
        %741 = vmatpush1.msra.mxu0 0.0
        %742 = vmatprep.subr.mxu0 0.0
        %743 = vmatpush1.msra.mxu0 0.0
        %744 = vmatprep.subr.mxu0 0.0
        %745 = vmatpush1.msra.mxu0 0.0
        %746 = vmatprep.subr.mxu0 0.0
        %747 = vmatpush1.msra.mxu0 0.0
        %748 = vmatprep.subr.mxu0 0.0
        %749 = vmatpush1.msra.mxu0 0.0
        %750 = vmatprep.mubr.f32.mxu0 0.0
        %751 = vmatmul.mubr.f32.gmra.mrb[0].mxu0 %v681
        %v752 = vpop.f32.mrb[0].mxu0
        %v753 = vadd.f32 %v594, %v752
        %v754 = vpop.f32.mrb[0].mxu0
        %v755 = vadd.f32 %v596, %v754
        %756 = vmatprep.mubr.f32.mxu0 0.0
        %757 = vmatmul.mubr.f32.gmra.mrb[0].mxu0 %v684
        %v758 = vpop.f32.mrb[0].mxu0
        %v759 = vadd.f32 %v600, %v758
        %v760 = vpop.f32.mrb[0].mxu0
        %v761 = vadd.f32 %v602, %v760
        %762 = vdwg.mxu0
        %763 = vmatprep.subr.mxu0 0.0
        %764 = vmatpush1.msra.mxu0 %v455
        %765 = vmatprep.subr.mxu0 0.0
        %766 = vmatpush1.msra.mxu0 %v458
        %767 = vmatprep.subr.mxu0 0.0
        %768 = vmatpush1.msra.mxu0 %v461
        %769 = vmatprep.subr.mxu0 0.0
        %770 = vmatpush1.msra.mxu0 %v464
        %771 = vmatprep.subr.mxu0 0.0
        %772 = vmatpush1.msra.mxu0 %v467
        %773 = vmatprep.subr.mxu0 0.0
        %774 = vmatpush1.msra.mxu0 %v470
        %775 = vmatprep.subr.mxu0 0.0
        %776 = vmatpush1.msra.mxu0 %v473
        %777 = vmatprep.subr.mxu0 0.0
        %778 = vmatpush1.msra.mxu0 %v476
        %779 = vmatprep.subr.mxu0 0.0
        %780 = vmatpush1.msra.mxu0 0.0
        %781 = vmatprep.subr.mxu0 0.0
        %782 = vmatpush1.msra.mxu0 0.0
        %783 = vmatprep.subr.mxu0 0.0
        %784 = vmatpush1.msra.mxu0 0.0
        %785 = vmatprep.subr.mxu0 0.0
        %786 = vmatpush1.msra.mxu0 0.0
        %787 = vmatprep.subr.mxu0 0.0
        %788 = vmatpush1.msra.mxu0 0.0
        %789 = vmatprep.subr.mxu0 0.0
        %790 = vmatpush1.msra.mxu0 0.0
        %791 = vmatprep.subr.mxu0 0.0
        %792 = vmatpush1.msra.mxu0 0.0
        %793 = vmatprep.subr.mxu0 0.0
        %794 = vmatpush1.msra.mxu0 0.0
        %795 = vmatprep.subr.mxu0 0.0
        %796 = vmatpush1.msra.mxu0 0.0
        %797 = vmatprep.subr.mxu0 0.0
        %798 = vmatpush1.msra.mxu0 0.0
        %799 = vmatprep.subr.mxu0 0.0
        %800 = vmatpush1.msra.mxu0 0.0
        %801 = vmatprep.subr.mxu0 0.0
        %802 = vmatpush1.msra.mxu0 0.0
        %803 = vmatprep.subr.mxu0 0.0
        %804 = vmatpush1.msra.mxu0 0.0
        %805 = vmatprep.subr.mxu0 0.0
        %806 = vmatpush1.msra.mxu0 0.0
        %807 = vmatprep.subr.mxu0 0.0
        %808 = vmatpush1.msra.mxu0 0.0
        %809 = vmatprep.subr.mxu0 0.0
        %810 = vmatpush1.msra.mxu0 0.0
        %811 = vmatprep.subr.mxu0 0.0
        %812 = vmatpush1.msra.mxu0 0.0
        %813 = vmatprep.subr.mxu0 0.0
        %814 = vmatpush1.msra.mxu0 0.0
        %815 = vmatprep.subr.mxu0 0.0
        %816 = vmatpush1.msra.mxu0 0.0
        %817 = vmatprep.subr.mxu0 0.0
        %818 = vmatpush1.msra.mxu0 0.0
        %819 = vmatprep.subr.mxu0 0.0
        %820 = vmatpush1.msra.mxu0 0.0
        %821 = vmatprep.subr.mxu0 0.0
        %822 = vmatpush1.msra.mxu0 0.0
        %823 = vmatprep.subr.mxu0 0.0
        %824 = vmatpush1.msra.mxu0 0.0
        %825 = vmatprep.subr.mxu0 0.0
        %826 = vmatpush1.msra.mxu0 0.0
        %827 = vmatprep.mubr.f32.mxu0 0.0
        %828 = vmatmul.mubr.f32.gmra.mrb[0].mxu0 %v681
        %v829 = vpop.f32.mrb[0].mxu0
        %v830 = vadd.f32 %v671, %v829
        %v831 = vpop.f32.mrb[0].mxu0
        %832 = vmatprep.mubr.f32.mxu0 0.0
        %833 = vmatmul.mubr.f32.gmra.mrb[0].mxu0 %v684
        %v834 = vpop.f32.mrb[0].mxu0
        %v835 = vadd.f32 %v676, %v834
        %v836 = vpop.f32.mrb[0].mxu0
        %837 = vdwg.mxu0
        %vm844 = vcmask 1040384
        %v845 = vrot.slane %v753, 7
        %v846 = vrot.slane %v755, 7
        %v847 = vrot.slane %v830, 7
        %v848 = vrot.slane %v759, 7
        %v849 = vsel %vm844, %v845, %v848
        %v850 = vrot.slane %v761, 7
        %v851 = vsel %vm844, %v846, %v850
        %v852 = vrot.slane %v835, 7
        %v853 = vsel %vm844, %v847, %v852
        %863 = vst [vmem:[#allocation2] sm:$0xfe] %v845
        %864 = vst [vmem:[#allocation2 + $0x8] sm:$0xfe] %v846
        %vm865 = vcmask 261121
        %866 = vst.msk [vmem:[#allocation2 + $0x10] sm:$0xfe] %vm865, %v847
        %867 = vst [vmem:[#allocation2 + $0x18] sm:$0xff] %v849
        %868 = vst [vmem:[#allocation2 + $0x20] sm:$0xff] %v851
        %vm869 = vcmask 261120
        %870 = vst.msk [vmem:[#allocation2 + $0x28] sm:$0xff] %vm869, %v853
        %871 = vst [vmem:[#allocation2 + $0x30] sm:$0x1] %v848
        %872 = vst [vmem:[#allocation2 + $0x38] sm:$0x1] %v850
        %vm873 = vcmask 253952
        %874 = vst.msk [vmem:[#allocation2 + $0x40] sm:$0x1] %vm873, %v852
        %v875 = vld [vmem:[#allocation2] sm:$0xff]
        %v876 = vld [vmem:[#allocation2 + $0x8] sm:$0xff]
        %v877 = vld [vmem:[#allocation2 + $0x10] sm:$0xff]
        %v878 = vld [vmem:[#allocation2 + $0x18] sm:$0xff]
        %v879 = vld [vmem:[#allocation2 + $0x20] sm:$0xff]
        %v880 = vld [vmem:[#allocation2 + $0x28] sm:$0xff]
        %v881 = vld [vmem:[%s5] sm:$0xff]
        %v882 = vld [vmem:[%s5 + $0x8] sm:$0xff]
        %v883 = vld [vmem:[%s5 + $0x10] sm:$0xff]
        %v884 = vld [vmem:[%s5 + $0x18] sm:$0xff]
        %v885 = vld [vmem:[%s5 + $0x20] sm:$0xff]
        %v886 = vld [vmem:[%s5 + $0x28] sm:$0xff]
        %v887 = vld [vmem:[%s5 + $0x30] sm:$0xff]
        %v888 = vld [vmem:[%s5 + $0x38] sm:$0xff]
        %v889 = vld [vmem:[%s5 + $0x40] sm:$0xff]
        %v890 = vld [vmem:[%s5 + $0x48] sm:$0xff]
        %v891 = vld [vmem:[%s5 + $0x50] sm:$0xff]
        %v892 = vld [vmem:[%s5 + $0x58] sm:$0xff]
        %v893 = vld [vmem:[%s5 + $0x60] sm:$0xff]
        %v894 = vld [vmem:[%s5 + $0x68] sm:$0xff]
        %v895 = vld [vmem:[%s5 + $0x70] sm:$0xff]
        %v896 = vld [vmem:[%s5 + $0x78] sm:$0xff]
        %v897 = vld [vmem:[%s5 + $0x80] sm:$0xff]
        %v898 = vld [vmem:[%s5 + $0x88] sm:$0xff]
        %v899 = vld [vmem:[%s5 + $0x90] sm:$0xff]
        %v900 = vld [vmem:[%s5 + $0x98] sm:$0xff]
        %v901 = vld [vmem:[%s5 + $0xa0] sm:$0xff]
        %v902 = vld [vmem:[%s5 + $0xa8] sm:$0xff]
        %v903 = vld [vmem:[%s5 + $0xb0] sm:$0xff]
        %v904 = vld [vmem:[%s5 + $0xb8] sm:$0xff]
        %v905 = vld [vmem:[%s5 + $0xc0] sm:$0xff]
        %v906 = vld [vmem:[%s5 + $0xc8] sm:$0xff]
        %v907 = vld [vmem:[%s5 + $0xd0] sm:$0xff]
        %v908 = vld [vmem:[%s5 + $0xd8] sm:$0xff]
        %v909 = vld [vmem:[%s5 + $0xe0] sm:$0xff]
        %v910 = vld [vmem:[%s5 + $0xe8] sm:$0xff]
        %v911 = vld [vmem:[%s5 + $0xf0] sm:$0xff]
        %v912 = vld [vmem:[%s5 + $0xf8] sm:$0xff]
        %v913 = vld [vmem:[%s5 + $0x100] sm:$0xff]
        %v914 = vld [vmem:[%s5 + $0x108] sm:$0xff]
        %v915 = vld [vmem:[%s5 + $0x110] sm:$0xff]
        %v916 = vld [vmem:[%s5 + $0x118] sm:$0xff]
        %v917 = vld [vmem:[%s5 + $0x120] sm:$0xff]
        %v918 = vld [vmem:[%s5 + $0x128] sm:$0xff]
        %v919 = vld [vmem:[%s5 + $0x130] sm:$0xff]
        %v920 = vld [vmem:[%s5 + $0x138] sm:$0xff]
        %v921 = vld [vmem:[%s5 + $0x140] sm:$0xff]
        %v922 = vld [vmem:[%s5 + $0x148] sm:$0xff]
        %v923 = vld [vmem:[%s5 + $0x150] sm:$0xff]
        %v924 = vld [vmem:[%s5 + $0x158] sm:$0xff]
        %v925 = vld [vmem:[%s5 + $0x160] sm:$0xff]
        %v926 = vld [vmem:[%s5 + $0x168] sm:$0xff]
        %v927 = vld [vmem:[%s5 + $0x170] sm:$0xff]
        %v928 = vld [vmem:[%s5 + $0x178] sm:$0xff]
        %v929 = vld [vmem:[%s5 + $0x180] sm:$0xff]
        %v930 = vld [vmem:[%s5 + $0x188] sm:$0xff]
        %v931 = vld [vmem:[%s5 + $0x190] sm:$0xff]
        %v932 = vld [vmem:[%s5 + $0x198] sm:$0xff]
        %v933 = vld [vmem:[%s5 + $0x1a0] sm:$0xff]
        %v934 = vld [vmem:[%s5 + $0x1a8] sm:$0xff]
        %v935 = vld [vmem:[%s5 + $0x1b0] sm:$0xff]
        %v936 = vld [vmem:[%s5 + $0x1b8] sm:$0xff]
        %v937 = vld [vmem:[%s5 + $0x1c0] sm:$0xff]
        %v938 = vld [vmem:[%s5 + $0x1c8] sm:$0xff]
        %v939 = vld [vmem:[%s5 + $0x1d0] sm:$0xff]
        %v940 = vld [vmem:[%s5 + $0x1d8] sm:$0xff]
        %v941 = vld [vmem:[%s5 + $0x1e0] sm:$0xff]
        %v942 = vld [vmem:[%s5 + $0x1e8] sm:$0xff]
        %v943 = vld [vmem:[%s5 + $0x1f0] sm:$0xff]
        %v944 = vld [vmem:[%s5 + $0x1f8] sm:$0xff]
        %v945 = vld [vmem:[%s5 + $0x200] sm:$0xff]
        %v946 = vld [vmem:[%s5 + $0x208] sm:$0xff]
        %v947 = vld [vmem:[%s5 + $0x210] sm:$0xff]
        %v948 = vld [vmem:[%s5 + $0x218] sm:$0xff]
        %v949 = vld [vmem:[%s5 + $0x220] sm:$0xff]
        %v950 = vld [vmem:[%s5 + $0x228] sm:$0xff]
        %v951 = vld [vmem:[%s5 + $0x230] sm:$0xff]
        %v952 = vld [vmem:[%s5 + $0x238] sm:$0xff]
        %v953 = vld [vmem:[#allocation2] sm:$0xfe]
        %v954 = vld [vmem:[#allocation2 + $0x8] sm:$0xfe]
        %v955 = vld [vmem:[#allocation2 + $0x10] sm:$0xfe]
        %v956 = vld [vmem:[#allocation2 + $0x30] sm:$0x1]
        %v957 = vld [vmem:[#allocation2 + $0x38] sm:$0x1]
        %v958 = vld [vmem:[#allocation2 + $0x40] sm:$0x1]
        %s959 = scalar_lea.vmem %s5, 576
        %v960 = vld [vmem:[%s959] sm:$0xff]
        %v961 = vld [vmem:[%s959 + $0x8] sm:$0xff]
        %v962 = vld [vmem:[%s959 + $0x10] sm:$0xff]
        %v963 = vld [vmem:[%s959 + $0x18] sm:$0xff]
        %v964 = vld [vmem:[%s959 + $0x20] sm:$0xff]
        %v965 = vld [vmem:[%s959 + $0x28] sm:$0xff]
        %v966 = vld [vmem:[%s959 + $0x30] sm:$0xff]
        %v967 = vld [vmem:[%s959 + $0x38] sm:$0xff]
        %v968 = vld [vmem:[%s959 + $0x40] sm:$0xff]
        %v969 = vld [vmem:[%s959 + $0x48] sm:$0xff]
        %v970 = vld [vmem:[%s959 + $0x50] sm:$0xff]
        %v971 = vld [vmem:[%s959 + $0x58] sm:$0xff]
        %v972 = vld [vmem:[%s959 + $0x60] sm:$0xff]
        %v973 = vld [vmem:[%s959 + $0x68] sm:$0xff]
        %v974 = vld [vmem:[%s959 + $0x70] sm:$0xff]
        %v975 = vld [vmem:[%s959 + $0x78] sm:$0xff]
        %v976 = vld [vmem:[%s959 + $0x80] sm:$0xff]
        %v977 = vld [vmem:[%s959 + $0x88] sm:$0xff]
        %v978 = vld [vmem:[%s959 + $0x90] sm:$0xff]
        %v979 = vld [vmem:[%s959 + $0x98] sm:$0xff]
        %v980 = vld [vmem:[%s959 + $0xa0] sm:$0xff]
        %v981 = vld [vmem:[%s959 + $0xa8] sm:$0xff]
        %v982 = vld [vmem:[%s959 + $0xb0] sm:$0xff]
        %v983 = vld [vmem:[%s959 + $0xb8] sm:$0xff]
        %v984 = vld [vmem:[%s959 + $0xc0] sm:$0xff]
        %v985 = vld [vmem:[%s959 + $0xc8] sm:$0xff]
        %v986 = vld [vmem:[%s959 + $0xd0] sm:$0xff]
        %v987 = vld [vmem:[%s959 + $0xd8] sm:$0xff]
        %v988 = vld [vmem:[%s959 + $0xe0] sm:$0xff]
        %v989 = vld [vmem:[%s959 + $0xe8] sm:$0xff]
        %v990 = vld [vmem:[%s959 + $0xf0] sm:$0xff]
        %v991 = vld [vmem:[%s959 + $0xf8] sm:$0xff]
        %v992 = vld [vmem:[%s959 + $0x100] sm:$0xff]
        %v993 = vld [vmem:[%s959 + $0x108] sm:$0xff]
        %v994 = vld [vmem:[%s959 + $0x110] sm:$0xff]
        %v995 = vld [vmem:[%s959 + $0x118] sm:$0xff]
        %v996 = vld [vmem:[%s959 + $0x120] sm:$0xff]
        %v997 = vld [vmem:[%s959 + $0x128] sm:$0xff]
        %v998 = vld [vmem:[%s959 + $0x130] sm:$0xff]
        %v999 = vld [vmem:[%s959 + $0x138] sm:$0xff]
        %v1000 = vld [vmem:[%s959 + $0x140] sm:$0xff]
        %v1001 = vld [vmem:[%s959 + $0x148] sm:$0xff]
        %v1002 = vld [vmem:[%s959 + $0x150] sm:$0xff]
        %v1003 = vld [vmem:[%s959 + $0x158] sm:$0xff]
        %v1004 = vld [vmem:[%s959 + $0x160] sm:$0xff]
        %v1005 = vld [vmem:[%s959 + $0x168] sm:$0xff]
        %v1006 = vld [vmem:[%s959 + $0x170] sm:$0xff]
        %v1007 = vld [vmem:[%s959 + $0x178] sm:$0xff]
        %v1008 = vld [vmem:[%s959 + $0x180] sm:$0xff]
        %v1009 = vld [vmem:[%s959 + $0x188] sm:$0xff]
        %v1010 = vld [vmem:[%s959 + $0x190] sm:$0xff]
        %v1011 = vld [vmem:[%s959 + $0x198] sm:$0xff]
        %v1012 = vld [vmem:[%s959 + $0x1a0] sm:$0xff]
        %v1013 = vld [vmem:[%s959 + $0x1a8] sm:$0xff]
        %v1014 = vld [vmem:[%s959 + $0x1b0] sm:$0xff]
        %v1015 = vld [vmem:[%s959 + $0x1b8] sm:$0xff]
        %v1016 = vld [vmem:[%s959 + $0x1c0] sm:$0xff]
        %v1017 = vld [vmem:[%s959 + $0x1c8] sm:$0xff]
        %v1018 = vld [vmem:[%s959 + $0x1d0] sm:$0xff]
        %v1019 = vld [vmem:[%s959 + $0x1d8] sm:$0xff]
        %v1020 = vld [vmem:[%s959 + $0x1e0] sm:$0xff]
        %v1021 = vld [vmem:[%s959 + $0x1e8] sm:$0xff]
        %v1022 = vld [vmem:[%s959 + $0x1f0] sm:$0xff]
        %v1023 = vld [vmem:[%s959 + $0x1f8] sm:$0xff]
        %v1024 = vld [vmem:[%s959 + $0x200] sm:$0xff]
        %v1025 = vld [vmem:[%s959 + $0x208] sm:$0xff]
        %v1026 = vld [vmem:[%s959 + $0x210] sm:$0xff]
        %v1027 = vld [vmem:[%s959 + $0x218] sm:$0xff]
        %v1028 = vld [vmem:[%s959 + $0x220] sm:$0xff]
        %v1029 = vld [vmem:[%s959 + $0x228] sm:$0xff]
        %v1030 = vld [vmem:[%s959 + $0x230] sm:$0xff]
        %v1031 = vld [vmem:[%s959 + $0x238] sm:$0xff]
        %vm1041 = vcmask 1046528
        %v1042 = vrot.slane %v953, 1
        %v1043 = vrot.slane %v878, 1
        %v1044 = vsel %vm1041, %v1042, %v1043
        %v1045 = vrot.slane %v954, 1
        %v1046 = vrot.slane %v879, 1
        %v1047 = vsel %vm1041, %v1045, %v1046
        %v1048 = vrot.slane %v955, 1
        %v1049 = vrot.slane %v880, 1
        %v1050 = vsel %vm1041, %v1048, %v1049
        %v1051 = vrot.slane %v956, 1
        %v1052 = vsel %vm1041, %v1043, %v1051
        %v1053 = vrot.slane %v957, 1
        %v1054 = vsel %vm1041, %v1046, %v1053
        %v1055 = vrot.slane %v958, 1
        %v1056 = vsel %vm1041, %v1049, %v1055
        %v1061 = vsel %vm869, %v1050, 0
        %v1063 = vsel %vm869, %v1056, 0
        %1065 = vmatprep.subr.mxu0 %v961
        %1066 = vmatpush1.msra.mxu0 %v960
        %1067 = vmatprep.subr.mxu0 %v963
        %1068 = vmatpush1.msra.mxu0 %v962
        %1069 = vmatprep.subr.mxu0 %v965
        %1070 = vmatpush1.msra.mxu0 %v964
        %1071 = vmatprep.subr.mxu0 %v967
        %1072 = vmatpush1.msra.mxu0 %v966
        %1073 = vmatprep.subr.mxu0 %v969
        %1074 = vmatpush1.msra.mxu0 %v968
        %1075 = vmatprep.subr.mxu0 %v971
        %1076 = vmatpush1.msra.mxu0 %v970
        %1077 = vmatprep.subr.mxu0 %v973
        %1078 = vmatpush1.msra.mxu0 %v972
        %1079 = vmatprep.subr.mxu0 %v975
        %1080 = vmatpush1.msra.mxu0 %v974
        %1081 = vmatprep.subr.mxu0 %v977
        %1082 = vmatpush1.msra.mxu0 %v976
        %1083 = vmatprep.subr.mxu0 %v979
        %1084 = vmatpush1.msra.mxu0 %v978
        %1085 = vmatprep.subr.mxu0 %v981
        %1086 = vmatpush1.msra.mxu0 %v980
        %1087 = vmatprep.subr.mxu0 %v983
        %1088 = vmatpush1.msra.mxu0 %v982
        %1089 = vmatprep.subr.mxu0 %v985
        %1090 = vmatpush1.msra.mxu0 %v984
        %1091 = vmatprep.subr.mxu0 %v987
        %1092 = vmatpush1.msra.mxu0 %v986
        %1093 = vmatprep.subr.mxu0 %v989
        %1094 = vmatpush1.msra.mxu0 %v988
        %1095 = vmatprep.subr.mxu0 %v991
        %1096 = vmatpush1.msra.mxu0 %v990
        %1097 = vmatprep.subr.mxu0 %v993
        %1098 = vmatpush1.msra.mxu0 %v992
        %1099 = vmatprep.subr.mxu0 %v995
        %1100 = vmatpush1.msra.mxu0 %v994
        %1101 = vmatprep.subr.mxu0 %v997
        %1102 = vmatpush1.msra.mxu0 %v996
        %1103 = vmatprep.subr.mxu0 %v999
        %1104 = vmatpush1.msra.mxu0 %v998
        %1105 = vmatprep.subr.mxu0 %v1001
        %1106 = vmatpush1.msra.mxu0 %v1000
        %1107 = vmatprep.subr.mxu0 %v1003
        %1108 = vmatpush1.msra.mxu0 %v1002
        %1109 = vmatprep.subr.mxu0 %v1005
        %1110 = vmatpush1.msra.mxu0 %v1004
        %1111 = vmatprep.subr.mxu0 %v1007
        %1112 = vmatpush1.msra.mxu0 %v1006
        %1113 = vmatprep.subr.mxu0 %v1009
        %1114 = vmatpush1.msra.mxu0 %v1008
        %1115 = vmatprep.subr.mxu0 %v1011
        %1116 = vmatpush1.msra.mxu0 %v1010
        %1117 = vmatprep.subr.mxu0 %v1013
        %1118 = vmatpush1.msra.mxu0 %v1012
        %1119 = vmatprep.subr.mxu0 %v1015
        %1120 = vmatpush1.msra.mxu0 %v1014
        %1121 = vmatprep.subr.mxu0 %v1017
        %1122 = vmatpush1.msra.mxu0 %v1016
        %1123 = vmatprep.subr.mxu0 %v1019
        %1124 = vmatpush1.msra.mxu0 %v1018
        %1125 = vmatprep.subr.mxu0 %v1021
        %1126 = vmatpush1.msra.mxu0 %v1020
        %1127 = vmatprep.subr.mxu0 %v1023
        %1128 = vmatpush1.msra.mxu0 %v1022
        %1129 = vmatprep.mubr.f32.mxu0 %v1047
        %1130 = vmatmul.mubr.f32.gmra.mrb[0].mxu0 %v1044
        %v1131 = vpop.f32.mrb[0].mxu0
        %v1132 = vadd.f32 0.0, %v1131
        %v1133 = vpop.f32.mrb[0].mxu0
        %v1134 = vadd.f32 0.0, %v1133
        %1135 = vmatprep.mubr.f32.mxu0 %v1054
        %1136 = vmatmul.mubr.f32.gmra.mrb[0].mxu0 %v1052
        %v1137 = vpop.f32.mrb[0].mxu0
        %v1138 = vadd.f32 0.0, %v1137
        %v1139 = vpop.f32.mrb[0].mxu0
        %v1140 = vadd.f32 0.0, %v1139
        %1141 = vdwg.mxu0
        %1142 = vmatprep.subr.mxu0 %v1025
        %1143 = vmatpush1.msra.mxu0 %v1024
        %1144 = vmatprep.subr.mxu0 %v1027
        %1145 = vmatpush1.msra.mxu0 %v1026
        %1146 = vmatprep.subr.mxu0 %v1029
        %1147 = vmatpush1.msra.mxu0 %v1028
        %1148 = vmatprep.subr.mxu0 %v1031
        %1149 = vmatpush1.msra.mxu0 %v1030
        %1150 = vmatprep.subr.mxu0 0.0
        %1151 = vmatpush1.msra.mxu0 0.0
        %1152 = vmatprep.subr.mxu0 0.0
        %1153 = vmatpush1.msra.mxu0 0.0
        %1154 = vmatprep.subr.mxu0 0.0
        %1155 = vmatpush1.msra.mxu0 0.0
        %1156 = vmatprep.subr.mxu0 0.0
        %1157 = vmatpush1.msra.mxu0 0.0
        %1158 = vmatprep.subr.mxu0 0.0
        %1159 = vmatpush1.msra.mxu0 0.0
        %1160 = vmatprep.subr.mxu0 0.0
        %1161 = vmatpush1.msra.mxu0 0.0
        %1162 = vmatprep.subr.mxu0 0.0
        %1163 = vmatpush1.msra.mxu0 0.0
        %1164 = vmatprep.subr.mxu0 0.0
        %1165 = vmatpush1.msra.mxu0 0.0
        %1166 = vmatprep.subr.mxu0 0.0
        %1167 = vmatpush1.msra.mxu0 0.0
        %1168 = vmatprep.subr.mxu0 0.0
        %1169 = vmatpush1.msra.mxu0 0.0
        %1170 = vmatprep.subr.mxu0 0.0
        %1171 = vmatpush1.msra.mxu0 0.0
        %1172 = vmatprep.subr.mxu0 0.0
        %1173 = vmatpush1.msra.mxu0 0.0
        %1174 = vmatprep.subr.mxu0 0.0
        %1175 = vmatpush1.msra.mxu0 0.0
        %1176 = vmatprep.subr.mxu0 0.0
        %1177 = vmatpush1.msra.mxu0 0.0
        %1178 = vmatprep.subr.mxu0 0.0
        %1179 = vmatpush1.msra.mxu0 0.0
        %1180 = vmatprep.subr.mxu0 0.0
        %1181 = vmatpush1.msra.mxu0 0.0
        %1182 = vmatprep.subr.mxu0 0.0
        %1183 = vmatpush1.msra.mxu0 0.0
        %1184 = vmatprep.subr.mxu0 0.0
        %1185 = vmatpush1.msra.mxu0 0.0
        %1186 = vmatprep.subr.mxu0 0.0
        %1187 = vmatpush1.msra.mxu0 0.0
        %1188 = vmatprep.subr.mxu0 0.0
        %1189 = vmatpush1.msra.mxu0 0.0
        %1190 = vmatprep.subr.mxu0 0.0
        %1191 = vmatpush1.msra.mxu0 0.0
        %1192 = vmatprep.subr.mxu0 0.0
        %1193 = vmatpush1.msra.mxu0 0.0
        %1194 = vmatprep.subr.mxu0 0.0
        %1195 = vmatpush1.msra.mxu0 0.0
        %1196 = vmatprep.subr.mxu0 0.0
        %1197 = vmatpush1.msra.mxu0 0.0
        %1198 = vmatprep.subr.mxu0 0.0
        %1199 = vmatpush1.msra.mxu0 0.0
        %1200 = vmatprep.subr.mxu0 0.0
        %1201 = vmatpush1.msra.mxu0 0.0
        %1202 = vmatprep.subr.mxu0 0.0
        %1203 = vmatpush1.msra.mxu0 0.0
        %1204 = vmatprep.subr.mxu0 0.0
        %1205 = vmatpush1.msra.mxu0 0.0
        %1206 = vmatprep.mubr.f32.mxu0 0.0
        %1207 = vmatmul.mubr.f32.gmra.mrb[0].mxu0 %v1061
        %v1208 = vpop.f32.mrb[0].mxu0
        %v1209 = vadd.f32 %v1132, %v1208
        %v1210 = vpop.f32.mrb[0].mxu0
        %v1211 = vadd.f32 %v1134, %v1210
        %1212 = vmatprep.mubr.f32.mxu0 0.0
        %1213 = vmatmul.mubr.f32.gmra.mrb[0].mxu0 %v1063
        %v1214 = vpop.f32.mrb[0].mxu0
        %v1215 = vadd.f32 %v1138, %v1214
        %v1216 = vpop.f32.mrb[0].mxu0
        %v1217 = vadd.f32 %v1140, %v1216
        %1218 = vdwg.mxu0
        %v1220 = vsel %vm869, %v877, 0
        %v1222 = vsel %vm869, %v880, 0
        %1224 = vmatprep.subr.mxu0 %v882
        %1225 = vmatpush1.msra.mxu0 %v881
        %1226 = vmatprep.subr.mxu0 %v884
        %1227 = vmatpush1.msra.mxu0 %v883
        %1228 = vmatprep.subr.mxu0 %v886
        %1229 = vmatpush1.msra.mxu0 %v885
        %1230 = vmatprep.subr.mxu0 %v888
        %1231 = vmatpush1.msra.mxu0 %v887
        %1232 = vmatprep.subr.mxu0 %v890
        %1233 = vmatpush1.msra.mxu0 %v889
        %1234 = vmatprep.subr.mxu0 %v892
        %1235 = vmatpush1.msra.mxu0 %v891
        %1236 = vmatprep.subr.mxu0 %v894
        %1237 = vmatpush1.msra.mxu0 %v893
        %1238 = vmatprep.subr.mxu0 %v896
        %1239 = vmatpush1.msra.mxu0 %v895
        %1240 = vmatprep.subr.mxu0 %v898
        %1241 = vmatpush1.msra.mxu0 %v897
        %1242 = vmatprep.subr.mxu0 %v900
        %1243 = vmatpush1.msra.mxu0 %v899
        %1244 = vmatprep.subr.mxu0 %v902
        %1245 = vmatpush1.msra.mxu0 %v901
        %1246 = vmatprep.subr.mxu0 %v904
        %1247 = vmatpush1.msra.mxu0 %v903
        %1248 = vmatprep.subr.mxu0 %v906
        %1249 = vmatpush1.msra.mxu0 %v905
        %1250 = vmatprep.subr.mxu0 %v908
        %1251 = vmatpush1.msra.mxu0 %v907
        %1252 = vmatprep.subr.mxu0 %v910
        %1253 = vmatpush1.msra.mxu0 %v909
        %1254 = vmatprep.subr.mxu0 %v912
        %1255 = vmatpush1.msra.mxu0 %v911
        %1256 = vmatprep.subr.mxu0 %v914
        %1257 = vmatpush1.msra.mxu0 %v913
        %1258 = vmatprep.subr.mxu0 %v916
        %1259 = vmatpush1.msra.mxu0 %v915
        %1260 = vmatprep.subr.mxu0 %v918
        %1261 = vmatpush1.msra.mxu0 %v917
        %1262 = vmatprep.subr.mxu0 %v920
        %1263 = vmatpush1.msra.mxu0 %v919
        %1264 = vmatprep.subr.mxu0 %v922
        %1265 = vmatpush1.msra.mxu0 %v921
        %1266 = vmatprep.subr.mxu0 %v924
        %1267 = vmatpush1.msra.mxu0 %v923
        %1268 = vmatprep.subr.mxu0 %v926
        %1269 = vmatpush1.msra.mxu0 %v925
        %1270 = vmatprep.subr.mxu0 %v928
        %1271 = vmatpush1.msra.mxu0 %v927
        %1272 = vmatprep.subr.mxu0 %v930
        %1273 = vmatpush1.msra.mxu0 %v929
        %1274 = vmatprep.subr.mxu0 %v932
        %1275 = vmatpush1.msra.mxu0 %v931
        %1276 = vmatprep.subr.mxu0 %v934
        %1277 = vmatpush1.msra.mxu0 %v933
        %1278 = vmatprep.subr.mxu0 %v936
        %1279 = vmatpush1.msra.mxu0 %v935
        %1280 = vmatprep.subr.mxu0 %v938
        %1281 = vmatpush1.msra.mxu0 %v937
        %1282 = vmatprep.subr.mxu0 %v940
        %1283 = vmatpush1.msra.mxu0 %v939
        %1284 = vmatprep.subr.mxu0 %v942
        %1285 = vmatpush1.msra.mxu0 %v941
        %1286 = vmatprep.subr.mxu0 %v944
        %1287 = vmatpush1.msra.mxu0 %v943
        %1288 = vmatprep.mubr.f32.mxu0 %v876
        %1289 = vmatmul.mubr.f32.gmra.mrb[0].mxu0 %v875
        %v1290 = vpop.f32.mrb[0].mxu0
        %v1291 = vadd.f32 %v1209, %v1290
        %v1292 = vpop.f32.mrb[0].mxu0
        %v1293 = vadd.f32 %v1211, %v1292
        %1294 = vmatprep.mubr.f32.mxu0 %v879
        %1295 = vmatmul.mubr.f32.gmra.mrb[0].mxu0 %v878
        %v1296 = vpop.f32.mrb[0].mxu0
        %v1297 = vadd.f32 %v1215, %v1296
        %v1298 = vpop.f32.mrb[0].mxu0
        %v1299 = vadd.f32 %v1217, %v1298
        %1300 = vdwg.mxu0
        %1301 = vmatprep.subr.mxu0 %v946
        %1302 = vmatpush1.msra.mxu0 %v945
        %1303 = vmatprep.subr.mxu0 %v948
        %1304 = vmatpush1.msra.mxu0 %v947
        %1305 = vmatprep.subr.mxu0 %v950
        %1306 = vmatpush1.msra.mxu0 %v949
        %1307 = vmatprep.subr.mxu0 %v952
        %1308 = vmatpush1.msra.mxu0 %v951
        %1309 = vmatprep.subr.mxu0 0.0
        %1310 = vmatpush1.msra.mxu0 0.0
        %1311 = vmatprep.subr.mxu0 0.0
        %1312 = vmatpush1.msra.mxu0 0.0
        %1313 = vmatprep.subr.mxu0 0.0
        %1314 = vmatpush1.msra.mxu0 0.0
        %1315 = vmatprep.subr.mxu0 0.0
        %1316 = vmatpush1.msra.mxu0 0.0
        %1317 = vmatprep.subr.mxu0 0.0
        %1318 = vmatpush1.msra.mxu0 0.0
        %1319 = vmatprep.subr.mxu0 0.0
        %1320 = vmatpush1.msra.mxu0 0.0
        %1321 = vmatprep.subr.mxu0 0.0
        %1322 = vmatpush1.msra.mxu0 0.0
        %1323 = vmatprep.subr.mxu0 0.0
        %1324 = vmatpush1.msra.mxu0 0.0
        %1325 = vmatprep.subr.mxu0 0.0
        %1326 = vmatpush1.msra.mxu0 0.0
        %1327 = vmatprep.subr.mxu0 0.0
        %1328 = vmatpush1.msra.mxu0 0.0
        %1329 = vmatprep.subr.mxu0 0.0
        %1330 = vmatpush1.msra.mxu0 0.0
        %1331 = vmatprep.subr.mxu0 0.0
        %1332 = vmatpush1.msra.mxu0 0.0
        %1333 = vmatprep.subr.mxu0 0.0
        %1334 = vmatpush1.msra.mxu0 0.0
        %1335 = vmatprep.subr.mxu0 0.0
        %1336 = vmatpush1.msra.mxu0 0.0
        %1337 = vmatprep.subr.mxu0 0.0
        %1338 = vmatpush1.msra.mxu0 0.0
        %1339 = vmatprep.subr.mxu0 0.0
        %1340 = vmatpush1.msra.mxu0 0.0
        %1341 = vmatprep.subr.mxu0 0.0
        %1342 = vmatpush1.msra.mxu0 0.0
        %1343 = vmatprep.subr.mxu0 0.0
        %1344 = vmatpush1.msra.mxu0 0.0
        %1345 = vmatprep.subr.mxu0 0.0
        %1346 = vmatpush1.msra.mxu0 0.0
        %1347 = vmatprep.subr.mxu0 0.0
        %1348 = vmatpush1.msra.mxu0 0.0
        %1349 = vmatprep.subr.mxu0 0.0
        %1350 = vmatpush1.msra.mxu0 0.0
        %1351 = vmatprep.subr.mxu0 0.0
        %1352 = vmatpush1.msra.mxu0 0.0
        %1353 = vmatprep.subr.mxu0 0.0
        %1354 = vmatpush1.msra.mxu0 0.0
        %1355 = vmatprep.subr.mxu0 0.0
        %1356 = vmatpush1.msra.mxu0 0.0
        %1357 = vmatprep.subr.mxu0 0.0
        %1358 = vmatpush1.msra.mxu0 0.0
        %1359 = vmatprep.subr.mxu0 0.0
        %1360 = vmatpush1.msra.mxu0 0.0
        %1361 = vmatprep.subr.mxu0 0.0
        %1362 = vmatpush1.msra.mxu0 0.0
        %1363 = vmatprep.subr.mxu0 0.0
        %1364 = vmatpush1.msra.mxu0 0.0
        %1365 = vmatprep.mubr.f32.mxu0 0.0
        %1366 = vmatmul.mubr.f32.gmra.mrb[0].mxu0 %v1220
        %v1367 = vpop.f32.mrb[0].mxu0
        %v1368 = vadd.f32 %v1291, %v1367
        %v1369 = vpop.f32.mrb[0].mxu0
        %v1370 = vadd.f32 %v1293, %v1369
        %1371 = vmatprep.mubr.f32.mxu0 0.0
        %1372 = vmatmul.mubr.f32.gmra.mrb[0].mxu0 %v1222
        %v1373 = vpop.f32.mrb[0].mxu0
        %v1374 = vadd.f32 %v1297, %v1373
        %v1375 = vpop.f32.mrb[0].mxu0
        %v1376 = vadd.f32 %v1299, %v1375
        %1377 = vdwg.mxu0
        %v1378 = vld [vmem:[#allocation2] sm:$0xfc]
        %v1379 = vld [vmem:[#allocation2 + $0x8] sm:$0xfc]
        %v1380 = vld [vmem:[#allocation2 + $0x10] sm:$0xfc]
        %v1381 = vld [vmem:[#allocation2 + $0x30] sm:$0x3]
        %v1382 = vld [vmem:[#allocation2 + $0x38] sm:$0x3]
        %v1383 = vld [vmem:[#allocation2 + $0x40] sm:$0x3]
        %s1384 = scalar_lea.vmem %s5, 1152
        %v1385 = vld [vmem:[%s1384] sm:$0xff]
        %v1386 = vld [vmem:[%s1384 + $0x8] sm:$0xff]
        %v1387 = vld [vmem:[%s1384 + $0x10] sm:$0xff]
        %v1388 = vld [vmem:[%s1384 + $0x18] sm:$0xff]
        %v1389 = vld [vmem:[%s1384 + $0x20] sm:$0xff]
        %v1390 = vld [vmem:[%s1384 + $0x28] sm:$0xff]
        %v1391 = vld [vmem:[%s1384 + $0x30] sm:$0xff]
        %v1392 = vld [vmem:[%s1384 + $0x38] sm:$0xff]
        %v1393 = vld [vmem:[%s1384 + $0x40] sm:$0xff]
        %v1394 = vld [vmem:[%s1384 + $0x48] sm:$0xff]
        %v1395 = vld [vmem:[%s1384 + $0x50] sm:$0xff]
        %v1396 = vld [vmem:[%s1384 + $0x58] sm:$0xff]
        %v1397 = vld [vmem:[%s1384 + $0x60] sm:$0xff]
        %v1398 = vld [vmem:[%s1384 + $0x68] sm:$0xff]
        %v1399 = vld [vmem:[%s1384 + $0x70] sm:$0xff]
        %v1400 = vld [vmem:[%s1384 + $0x78] sm:$0xff]
        %v1401 = vld [vmem:[%s1384 + $0x80] sm:$0xff]
        %v1402 = vld [vmem:[%s1384 + $0x88] sm:$0xff]
        %v1403 = vld [vmem:[%s1384 + $0x90] sm:$0xff]
        %v1404 = vld [vmem:[%s1384 + $0x98] sm:$0xff]
        %v1405 = vld [vmem:[%s1384 + $0xa0] sm:$0xff]
        %v1406 = vld [vmem:[%s1384 + $0xa8] sm:$0xff]
        %v1407 = vld [vmem:[%s1384 + $0xb0] sm:$0xff]
        %v1408 = vld [vmem:[%s1384 + $0xb8] sm:$0xff]
        %v1409 = vld [vmem:[%s1384 + $0xc0] sm:$0xff]
        %v1410 = vld [vmem:[%s1384 + $0xc8] sm:$0xff]
        %v1411 = vld [vmem:[%s1384 + $0xd0] sm:$0xff]
        %v1412 = vld [vmem:[%s1384 + $0xd8] sm:$0xff]
        %v1413 = vld [vmem:[%s1384 + $0xe0] sm:$0xff]
        %v1414 = vld [vmem:[%s1384 + $0xe8] sm:$0xff]
        %v1415 = vld [vmem:[%s1384 + $0xf0] sm:$0xff]
        %v1416 = vld [vmem:[%s1384 + $0xf8] sm:$0xff]
        %v1417 = vld [vmem:[%s1384 + $0x100] sm:$0xff]
        %v1418 = vld [vmem:[%s1384 + $0x108] sm:$0xff]
        %v1419 = vld [vmem:[%s1384 + $0x110] sm:$0xff]
        %v1420 = vld [vmem:[%s1384 + $0x118] sm:$0xff]
        %v1421 = vld [vmem:[%s1384 + $0x120] sm:$0xff]
        %v1422 = vld [vmem:[%s1384 + $0x128] sm:$0xff]
        %v1423 = vld [vmem:[%s1384 + $0x130] sm:$0xff]
        %v1424 = vld [vmem:[%s1384 + $0x138] sm:$0xff]
        %v1425 = vld [vmem:[%s1384 + $0x140] sm:$0xff]
        %v1426 = vld [vmem:[%s1384 + $0x148] sm:$0xff]
        %v1427 = vld [vmem:[%s1384 + $0x150] sm:$0xff]
        %v1428 = vld [vmem:[%s1384 + $0x158] sm:$0xff]
        %v1429 = vld [vmem:[%s1384 + $0x160] sm:$0xff]
        %v1430 = vld [vmem:[%s1384 + $0x168] sm:$0xff]
        %v1431 = vld [vmem:[%s1384 + $0x170] sm:$0xff]
        %v1432 = vld [vmem:[%s1384 + $0x178] sm:$0xff]
        %v1433 = vld [vmem:[%s1384 + $0x180] sm:$0xff]
        %v1434 = vld [vmem:[%s1384 + $0x188] sm:$0xff]
        %v1435 = vld [vmem:[%s1384 + $0x190] sm:$0xff]
        %v1436 = vld [vmem:[%s1384 + $0x198] sm:$0xff]
        %v1437 = vld [vmem:[%s1384 + $0x1a0] sm:$0xff]
        %v1438 = vld [vmem:[%s1384 + $0x1a8] sm:$0xff]
        %v1439 = vld [vmem:[%s1384 + $0x1b0] sm:$0xff]
        %v1440 = vld [vmem:[%s1384 + $0x1b8] sm:$0xff]
        %v1441 = vld [vmem:[%s1384 + $0x1c0] sm:$0xff]
        %v1442 = vld [vmem:[%s1384 + $0x1c8] sm:$0xff]
        %v1443 = vld [vmem:[%s1384 + $0x1d0] sm:$0xff]
        %v1444 = vld [vmem:[%s1384 + $0x1d8] sm:$0xff]
        %v1445 = vld [vmem:[%s1384 + $0x1e0] sm:$0xff]
        %v1446 = vld [vmem:[%s1384 + $0x1e8] sm:$0xff]
        %v1447 = vld [vmem:[%s1384 + $0x1f0] sm:$0xff]
        %v1448 = vld [vmem:[%s1384 + $0x1f8] sm:$0xff]
        %v1449 = vld [vmem:[%s1384 + $0x200] sm:$0xff]
        %v1450 = vld [vmem:[%s1384 + $0x208] sm:$0xff]
        %v1451 = vld [vmem:[%s1384 + $0x210] sm:$0xff]
        %v1452 = vld [vmem:[%s1384 + $0x218] sm:$0xff]
        %v1453 = vld [vmem:[%s1384 + $0x220] sm:$0xff]
        %v1454 = vld [vmem:[%s1384 + $0x228] sm:$0xff]
        %v1455 = vld [vmem:[%s1384 + $0x230] sm:$0xff]
        %v1456 = vld [vmem:[%s1384 + $0x238] sm:$0xff]
        %vm1463 = vcmask 1045504
        %v1464 = vrot.slane %v1378, 2
        %v1465 = vrot.slane %v878, 2
        %v1466 = vsel %vm1463, %v1464, %v1465
        %v1467 = vrot.slane %v1379, 2
        %v1468 = vrot.slane %v879, 2
        %v1469 = vsel %vm1463, %v1467, %v1468
        %v1470 = vrot.slane %v1380, 2
        %v1471 = vrot.slane %v880, 2
        %v1472 = vsel %vm1463, %v1470, %v1471
        %v1473 = vrot.slane %v1381, 2
        %v1474 = vsel %vm1463, %v1465, %v1473
        %v1475 = vrot.slane %v1382, 2
        %v1476 = vsel %vm1463, %v1468, %v1475
        %v1477 = vrot.slane %v1383, 2
        %v1478 = vsel %vm1463, %v1471, %v1477
        %v1483 = vsel %vm869, %v1472, 0
        %v1485 = vsel %vm869, %v1478, 0
        %1487 = vmatprep.subr.mxu0 %v1386
        %1488 = vmatpush1.msra.mxu0 %v1385
        %1489 = vmatprep.subr.mxu0 %v1388
        %1490 = vmatpush1.msra.mxu0 %v1387
        %1491 = vmatprep.subr.mxu0 %v1390
        %1492 = vmatpush1.msra.mxu0 %v1389
        %1493 = vmatprep.subr.mxu0 %v1392
        %1494 = vmatpush1.msra.mxu0 %v1391
        %1495 = vmatprep.subr.mxu0 %v1394
        %1496 = vmatpush1.msra.mxu0 %v1393
        %1497 = vmatprep.subr.mxu0 %v1396
        %1498 = vmatpush1.msra.mxu0 %v1395
        %1499 = vmatprep.subr.mxu0 %v1398
        %1500 = vmatpush1.msra.mxu0 %v1397
        %1501 = vmatprep.subr.mxu0 %v1400
        %1502 = vmatpush1.msra.mxu0 %v1399
        %1503 = vmatprep.subr.mxu0 %v1402
        %1504 = vmatpush1.msra.mxu0 %v1401
        %1505 = vmatprep.subr.mxu0 %v1404
        %1506 = vmatpush1.msra.mxu0 %v1403
        %1507 = vmatprep.subr.mxu0 %v1406
        %1508 = vmatpush1.msra.mxu0 %v1405
        %1509 = vmatprep.subr.mxu0 %v1408
        %1510 = vmatpush1.msra.mxu0 %v1407
        %1511 = vmatprep.subr.mxu0 %v1410
        %1512 = vmatpush1.msra.mxu0 %v1409
        %1513 = vmatprep.subr.mxu0 %v1412
        %1514 = vmatpush1.msra.mxu0 %v1411
        %1515 = vmatprep.subr.mxu0 %v1414
        %1516 = vmatpush1.msra.mxu0 %v1413
        %1517 = vmatprep.subr.mxu0 %v1416
        %1518 = vmatpush1.msra.mxu0 %v1415
        %1519 = vmatprep.subr.mxu0 %v1418
        %1520 = vmatpush1.msra.mxu0 %v1417
        %1521 = vmatprep.subr.mxu0 %v1420
        %1522 = vmatpush1.msra.mxu0 %v1419
        %1523 = vmatprep.subr.mxu0 %v1422
        %1524 = vmatpush1.msra.mxu0 %v1421
        %1525 = vmatprep.subr.mxu0 %v1424
        %1526 = vmatpush1.msra.mxu0 %v1423
        %1527 = vmatprep.subr.mxu0 %v1426
        %1528 = vmatpush1.msra.mxu0 %v1425
        %1529 = vmatprep.subr.mxu0 %v1428
        %1530 = vmatpush1.msra.mxu0 %v1427
        %1531 = vmatprep.subr.mxu0 %v1430
        %1532 = vmatpush1.msra.mxu0 %v1429
        %1533 = vmatprep.subr.mxu0 %v1432
        %1534 = vmatpush1.msra.mxu0 %v1431
        %1535 = vmatprep.subr.mxu0 %v1434
        %1536 = vmatpush1.msra.mxu0 %v1433
        %1537 = vmatprep.subr.mxu0 %v1436
        %1538 = vmatpush1.msra.mxu0 %v1435
        %1539 = vmatprep.subr.mxu0 %v1438
        %1540 = vmatpush1.msra.mxu0 %v1437
        %1541 = vmatprep.subr.mxu0 %v1440
        %1542 = vmatpush1.msra.mxu0 %v1439
        %1543 = vmatprep.subr.mxu0 %v1442
        %1544 = vmatpush1.msra.mxu0 %v1441
        %1545 = vmatprep.subr.mxu0 %v1444
        %1546 = vmatpush1.msra.mxu0 %v1443
        %1547 = vmatprep.subr.mxu0 %v1446
        %1548 = vmatpush1.msra.mxu0 %v1445
        %1549 = vmatprep.subr.mxu0 %v1448
        %1550 = vmatpush1.msra.mxu0 %v1447
        %1551 = vmatprep.mubr.f32.mxu0 %v1469
        %1552 = vmatmul.mubr.f32.gmra.mrb[0].mxu0 %v1466
        %v1553 = vpop.f32.mrb[0].mxu0
        %v1554 = vadd.f32 0.0, %v1553
        %v1555 = vpop.f32.mrb[0].mxu0
        %v1556 = vadd.f32 0.0, %v1555
        %1557 = vmatprep.mubr.f32.mxu0 %v1476
        %1558 = vmatmul.mubr.f32.gmra.mrb[0].mxu0 %v1474
        %v1559 = vpop.f32.mrb[0].mxu0
        %v1560 = vadd.f32 0.0, %v1559
        %v1561 = vpop.f32.mrb[0].mxu0
        %v1562 = vadd.f32 0.0, %v1561
        %1563 = vdwg.mxu0
        %1564 = vmatprep.subr.mxu0 %v1450
        %1565 = vmatpush1.msra.mxu0 %v1449
        %1566 = vmatprep.subr.mxu0 %v1452
        %1567 = vmatpush1.msra.mxu0 %v1451
        %1568 = vmatprep.subr.mxu0 %v1454
        %1569 = vmatpush1.msra.mxu0 %v1453
        %1570 = vmatprep.subr.mxu0 %v1456
        %1571 = vmatpush1.msra.mxu0 %v1455
        %1572 = vmatprep.subr.mxu0 0.0
        %1573 = vmatpush1.msra.mxu0 0.0
        %1574 = vmatprep.subr.mxu0 0.0
        %1575 = vmatpush1.msra.mxu0 0.0
        %1576 = vmatprep.subr.mxu0 0.0
        %1577 = vmatpush1.msra.mxu0 0.0
        %1578 = vmatprep.subr.mxu0 0.0
        %1579 = vmatpush1.msra.mxu0 0.0
        %1580 = vmatprep.subr.mxu0 0.0
        %1581 = vmatpush1.msra.mxu0 0.0
        %1582 = vmatprep.subr.mxu0 0.0
        %1583 = vmatpush1.msra.mxu0 0.0
        %1584 = vmatprep.subr.mxu0 0.0
        %1585 = vmatpush1.msra.mxu0 0.0
        %1586 = vmatprep.subr.mxu0 0.0
        %1587 = vmatpush1.msra.mxu0 0.0
        %1588 = vmatprep.subr.mxu0 0.0
        %1589 = vmatpush1.msra.mxu0 0.0
        %1590 = vmatprep.subr.mxu0 0.0
        %1591 = vmatpush1.msra.mxu0 0.0
        %1592 = vmatprep.subr.mxu0 0.0
        %1593 = vmatpush1.msra.mxu0 0.0
        %1594 = vmatprep.subr.mxu0 0.0
        %1595 = vmatpush1.msra.mxu0 0.0
        %1596 = vmatprep.subr.mxu0 0.0
        %1597 = vmatpush1.msra.mxu0 0.0
        %1598 = vmatprep.subr.mxu0 0.0
        %1599 = vmatpush1.msra.mxu0 0.0
        %1600 = vmatprep.subr.mxu0 0.0
        %1601 = vmatpush1.msra.mxu0 0.0
        %1602 = vmatprep.subr.mxu0 0.0
        %1603 = vmatpush1.msra.mxu0 0.0
        %1604 = vmatprep.subr.mxu0 0.0
        %1605 = vmatpush1.msra.mxu0 0.0
        %1606 = vmatprep.subr.mxu0 0.0
        %1607 = vmatpush1.msra.mxu0 0.0
        %1608 = vmatprep.subr.mxu0 0.0
        %1609 = vmatpush1.msra.mxu0 0.0
        %1610 = vmatprep.subr.mxu0 0.0
        %1611 = vmatpush1.msra.mxu0 0.0
        %1612 = vmatprep.subr.mxu0 0.0
        %1613 = vmatpush1.msra.mxu0 0.0
        %1614 = vmatprep.subr.mxu0 0.0
        %1615 = vmatpush1.msra.mxu0 0.0
        %1616 = vmatprep.subr.mxu0 0.0
        %1617 = vmatpush1.msra.mxu0 0.0
        %1618 = vmatprep.subr.mxu0 0.0
        %1619 = vmatpush1.msra.mxu0 0.0
        %1620 = vmatprep.subr.mxu0 0.0
        %1621 = vmatpush1.msra.mxu0 0.0
        %1622 = vmatprep.subr.mxu0 0.0
        %1623 = vmatpush1.msra.mxu0 0.0
        %1624 = vmatprep.subr.mxu0 0.0
        %1625 = vmatpush1.msra.mxu0 0.0
        %1626 = vmatprep.subr.mxu0 0.0
        %1627 = vmatpush1.msra.mxu0 0.0
        %1628 = vmatprep.mubr.f32.mxu0 0.0
        %1629 = vmatmul.mubr.f32.gmra.mrb[0].mxu0 %v1483
        %v1630 = vpop.f32.mrb[0].mxu0
        %v1631 = vadd.f32 %v1554, %v1630
        %v1632 = vpop.f32.mrb[0].mxu0
        %v1633 = vadd.f32 %v1556, %v1632
        %1634 = vmatprep.mubr.f32.mxu0 0.0
        %1635 = vmatmul.mubr.f32.gmra.mrb[0].mxu0 %v1485
        %v1636 = vpop.f32.mrb[0].mxu0
        %v1637 = vadd.f32 %v1560, %v1636
        %v1638 = vpop.f32.mrb[0].mxu0
        %v1639 = vadd.f32 %v1562, %v1638
        %1640 = vdwg.mxu0
        %v1641 = vadd.f32 %v1368, %v1631
        %v1642 = vadd.f32 %v1370, %v1633
        %v1643 = vadd.f32 %v1374, %v1637
        %v1644 = vadd.f32 %v1376, %v1639
        %v1645 = vld [vmem:[%s7] sm:$0x3]
        %v1647 = vlaneseq
        %v1648 = vshrl.u32 %v1647, 7
        %v1649 = vsub.s32 0, %v1648
        %v1650 = vrot.slane %v1645, %v1649
        %v1651 = vlaneseq
        %v1652 = vshrl.u32 %v1651, 7
        %v1653 = vsub.s32 1, %v1652
        %v1654 = vrot.slane %v1645, %v1653
        %v1657 = vadd.f32 %v1641, %v1650
        %v1658 = vadd.f32 %v1642, %v1654
        %v1659 = vadd.f32 %v1643, %v1650
        %v1660 = vadd.f32 %v1644, %v1654
        %v1661 = vmax.f32 %v1657, 0.0
        %v1662 = vmax.f32 %v1658, 0.0
        %v1663 = vmax.f32 %v1659, 0.0
        %v1664 = vmax.f32 %v1660, 0.0
        %v1669 = vrot.slane %v1661, 7
        %v1670 = vrot.slane %v1662, 7
        %v1671 = vrot.slane %v1663, 7
        %v1672 = vsel %vm844, %v1669, %v1671
        %v1673 = vrot.slane %v1664, 7
        %v1674 = vsel %vm844, %v1670, %v1673
        %1681 = vst [vmem:[#allocation3] sm:$0xfe] %v1669
        %vm1682 = vcmask 130049
        %1683 = vst.msk [vmem:[#allocation3 + $0x8] sm:$0xfe] %vm1682, %v1670
        %1684 = vst [vmem:[#allocation3 + $0x10] sm:$0xff] %v1672
        %vm1685 = vcmask 130048
        %1686 = vst.msk [vmem:[#allocation3 + $0x18] sm:$0xff] %vm1685, %v1674
        %1687 = vst [vmem:[#allocation3 + $0x20] sm:$0x1] %v1671
        %vm1688 = vcmask 122880
        %1689 = vst.msk [vmem:[#allocation3 + $0x28] sm:$0x1] %vm1688, %v1673
        %v1690 = vld [vmem:[#allocation3] sm:$0xff]
        %v1691 = vld [vmem:[#allocation3 + $0x8] sm:$0xff]
        %v1692 = vld [vmem:[#allocation3 + $0x10] sm:$0xff]
        %v1693 = vld [vmem:[#allocation3 + $0x18] sm:$0xff]
        %v1694 = vld [vmem:[%s6] sm:$0xff]
        %v1695 = vld [vmem:[%s6 + $0x8] sm:$0xff]
        %v1696 = vld [vmem:[%s6 + $0x10] sm:$0xff]
        %v1697 = vld [vmem:[%s6 + $0x18] sm:$0xff]
        %v1698 = vld [vmem:[%s6 + $0x20] sm:$0xff]
        %v1699 = vld [vmem:[%s6 + $0x28] sm:$0xff]
        %v1700 = vld [vmem:[%s6 + $0x30] sm:$0xff]
        %v1701 = vld [vmem:[%s6 + $0x38] sm:$0xff]
        %v1702 = vld [vmem:[%s6 + $0x40] sm:$0xff]
        %v1703 = vld [vmem:[%s6 + $0x48] sm:$0xff]
        %v1704 = vld [vmem:[%s6 + $0x50] sm:$0xff]
        %v1705 = vld [vmem:[%s6 + $0x58] sm:$0xff]
        %v1706 = vld [vmem:[%s6 + $0x60] sm:$0xff]
        %v1707 = vld [vmem:[%s6 + $0x68] sm:$0xff]
        %v1708 = vld [vmem:[%s6 + $0x70] sm:$0xff]
        %v1709 = vld [vmem:[%s6 + $0x78] sm:$0xff]
        %v1710 = vld [vmem:[%s6 + $0x80] sm:$0xff]
        %v1711 = vld [vmem:[%s6 + $0x88] sm:$0xff]
        %v1712 = vld [vmem:[#allocation3] sm:$0xfe]
        %v1713 = vld [vmem:[#allocation3 + $0x8] sm:$0xfe]
        %v1714 = vld [vmem:[#allocation3 + $0x20] sm:$0x1]
        %v1715 = vld [vmem:[#allocation3 + $0x28] sm:$0x1]
        %s1716 = scalar_lea.vmem %s6, 144
        %v1717 = vld [vmem:[%s1716] sm:$0xff]
        %v1718 = vld [vmem:[%s1716 + $0x8] sm:$0xff]
        %v1719 = vld [vmem:[%s1716 + $0x10] sm:$0xff]
        %v1720 = vld [vmem:[%s1716 + $0x18] sm:$0xff]
        %v1721 = vld [vmem:[%s1716 + $0x20] sm:$0xff]
        %v1722 = vld [vmem:[%s1716 + $0x28] sm:$0xff]
        %v1723 = vld [vmem:[%s1716 + $0x30] sm:$0xff]
        %v1724 = vld [vmem:[%s1716 + $0x38] sm:$0xff]
        %v1725 = vld [vmem:[%s1716 + $0x40] sm:$0xff]
        %v1726 = vld [vmem:[%s1716 + $0x48] sm:$0xff]
        %v1727 = vld [vmem:[%s1716 + $0x50] sm:$0xff]
        %v1728 = vld [vmem:[%s1716 + $0x58] sm:$0xff]
        %v1729 = vld [vmem:[%s1716 + $0x60] sm:$0xff]
        %v1730 = vld [vmem:[%s1716 + $0x68] sm:$0xff]
        %v1731 = vld [vmem:[%s1716 + $0x70] sm:$0xff]
        %v1732 = vld [vmem:[%s1716 + $0x78] sm:$0xff]
        %v1733 = vld [vmem:[%s1716 + $0x80] sm:$0xff]
        %v1734 = vld [vmem:[%s1716 + $0x88] sm:$0xff]
        %v1741 = vrot.slane %v1712, 1
        %v1742 = vrot.slane %v1692, 1
        %v1743 = vsel %vm1041, %v1741, %v1742
        %v1744 = vrot.slane %v1713, 1
        %v1745 = vrot.slane %v1693, 1
        %v1746 = vsel %vm1041, %v1744, %v1745
        %v1747 = vrot.slane %v1714, 1
        %v1748 = vsel %vm1041, %v1742, %v1747
        %v1749 = vrot.slane %v1715, 1
        %v1750 = vsel %vm1041, %v1745, %v1749
        %v1753 = vsel %vm1685, %v1746, 0
        %v1755 = vsel %vm1685, %v1750, 0
        %1757 = vmatprep.subr.mxu0 0.0
        %1758 = vmatpush1.msra.mxu0 %v1717
        %1759 = vmatprep.subr.mxu0 0.0
        %1760 = vmatpush1.msra.mxu0 %v1718
        %1761 = vmatprep.subr.mxu0 0.0
        %1762 = vmatpush1.msra.mxu0 %v1719
        %1763 = vmatprep.subr.mxu0 0.0
        %1764 = vmatpush1.msra.mxu0 %v1720
        %1765 = vmatprep.subr.mxu0 0.0
        %1766 = vmatpush1.msra.mxu0 %v1721
        %1767 = vmatprep.subr.mxu0 0.0
        %1768 = vmatpush1.msra.mxu0 %v1722
        %1769 = vmatprep.subr.mxu0 0.0
        %1770 = vmatpush1.msra.mxu0 %v1723
        %1771 = vmatprep.subr.mxu0 0.0
        %1772 = vmatpush1.msra.mxu0 %v1724
        %1773 = vmatprep.subr.mxu0 0.0
        %1774 = vmatpush1.msra.mxu0 %v1725
        %1775 = vmatprep.subr.mxu0 0.0
        %1776 = vmatpush1.msra.mxu0 %v1726
        %1777 = vmatprep.subr.mxu0 0.0
        %1778 = vmatpush1.msra.mxu0 %v1727
        %1779 = vmatprep.subr.mxu0 0.0
        %1780 = vmatpush1.msra.mxu0 %v1728
        %1781 = vmatprep.subr.mxu0 0.0
        %1782 = vmatpush1.msra.mxu0 %v1729
        %1783 = vmatprep.subr.mxu0 0.0
        %1784 = vmatpush1.msra.mxu0 %v1730
        %1785 = vmatprep.subr.mxu0 0.0
        %1786 = vmatpush1.msra.mxu0 %v1731
        %1787 = vmatprep.subr.mxu0 0.0
        %1788 = vmatpush1.msra.mxu0 %v1732
        %1789 = vmatprep.subr.mxu0 0.0
        %1790 = vmatpush1.msra.mxu0 %v1733
        %1791 = vmatprep.subr.mxu0 0.0
        %1792 = vmatpush1.msra.mxu0 %v1734
        %1793 = vmatprep.subr.mxu0 0.0
        %1794 = vmatpush1.msra.mxu0 0.0
        %1795 = vmatprep.subr.mxu0 0.0
        %1796 = vmatpush1.msra.mxu0 0.0
        %1797 = vmatprep.subr.mxu0 0.0
        %1798 = vmatpush1.msra.mxu0 0.0
        %1799 = vmatprep.subr.mxu0 0.0
        %1800 = vmatpush1.msra.mxu0 0.0
        %1801 = vmatprep.subr.mxu0 0.0
        %1802 = vmatpush1.msra.mxu0 0.0
        %1803 = vmatprep.subr.mxu0 0.0
        %1804 = vmatpush1.msra.mxu0 0.0
        %1805 = vmatprep.subr.mxu0 0.0
        %1806 = vmatpush1.msra.mxu0 0.0
        %1807 = vmatprep.subr.mxu0 0.0
        %1808 = vmatpush1.msra.mxu0 0.0
        %1809 = vmatprep.subr.mxu0 0.0
        %1810 = vmatpush1.msra.mxu0 0.0
        %1811 = vmatprep.subr.mxu0 0.0
        %1812 = vmatpush1.msra.mxu0 0.0
        %1813 = vmatprep.subr.mxu0 0.0
        %1814 = vmatpush1.msra.mxu0 0.0
        %1815 = vmatprep.subr.mxu0 0.0
        %1816 = vmatpush1.msra.mxu0 0.0
        %1817 = vmatprep.subr.mxu0 0.0
        %1818 = vmatpush1.msra.mxu0 0.0
        %1819 = vmatprep.subr.mxu0 0.0
        %1820 = vmatpush1.msra.mxu0 0.0
        %1821 = vmatprep.mubr.f32.mxu0 %v1753
        %1822 = vmatmul.mubr.f32.gmra.mrb[0].mxu0 %v1743
        %v1823 = vpop.f32.mrb[0].mxu0
        %v1824 = vadd.f32 0.0, %v1823
        %v1825 = vpop.f32.mrb[0].mxu0
        %1826 = vmatprep.mubr.f32.mxu0 %v1755
        %1827 = vmatmul.mubr.f32.gmra.mrb[0].mxu0 %v1748
        %v1828 = vpop.f32.mrb[0].mxu0
        %v1829 = vadd.f32 0.0, %v1828
        %v1830 = vpop.f32.mrb[0].mxu0
        %1831 = vdwg.mxu0
        %v1833 = vsel %vm1685, %v1691, 0
        %v1835 = vsel %vm1685, %v1693, 0
        %1837 = vmatprep.subr.mxu0 0.0
        %1838 = vmatpush1.msra.mxu0 %v1694
        %1839 = vmatprep.subr.mxu0 0.0
        %1840 = vmatpush1.msra.mxu0 %v1695
        %1841 = vmatprep.subr.mxu0 0.0
        %1842 = vmatpush1.msra.mxu0 %v1696
        %1843 = vmatprep.subr.mxu0 0.0
        %1844 = vmatpush1.msra.mxu0 %v1697
        %1845 = vmatprep.subr.mxu0 0.0
        %1846 = vmatpush1.msra.mxu0 %v1698
        %1847 = vmatprep.subr.mxu0 0.0
        %1848 = vmatpush1.msra.mxu0 %v1699
        %1849 = vmatprep.subr.mxu0 0.0
        %1850 = vmatpush1.msra.mxu0 %v1700
        %1851 = vmatprep.subr.mxu0 0.0
        %1852 = vmatpush1.msra.mxu0 %v1701
        %1853 = vmatprep.subr.mxu0 0.0
        %1854 = vmatpush1.msra.mxu0 %v1702
        %1855 = vmatprep.subr.mxu0 0.0
        %1856 = vmatpush1.msra.mxu0 %v1703
        %1857 = vmatprep.subr.mxu0 0.0
        %1858 = vmatpush1.msra.mxu0 %v1704
        %1859 = vmatprep.subr.mxu0 0.0
        %1860 = vmatpush1.msra.mxu0 %v1705
        %1861 = vmatprep.subr.mxu0 0.0
        %1862 = vmatpush1.msra.mxu0 %v1706
        %1863 = vmatprep.subr.mxu0 0.0
        %1864 = vmatpush1.msra.mxu0 %v1707
        %1865 = vmatprep.subr.mxu0 0.0
        %1866 = vmatpush1.msra.mxu0 %v1708
        %1867 = vmatprep.subr.mxu0 0.0
        %1868 = vmatpush1.msra.mxu0 %v1709
        %1869 = vmatprep.subr.mxu0 0.0
        %1870 = vmatpush1.msra.mxu0 %v1710
        %1871 = vmatprep.subr.mxu0 0.0
        %1872 = vmatpush1.msra.mxu0 %v1711
        %1873 = vmatprep.subr.mxu0 0.0
        %1874 = vmatpush1.msra.mxu0 0.0
        %1875 = vmatprep.subr.mxu0 0.0
        %1876 = vmatpush1.msra.mxu0 0.0
        %1877 = vmatprep.subr.mxu0 0.0
        %1878 = vmatpush1.msra.mxu0 0.0
        %1879 = vmatprep.subr.mxu0 0.0
        %1880 = vmatpush1.msra.mxu0 0.0
        %1881 = vmatprep.subr.mxu0 0.0
        %1882 = vmatpush1.msra.mxu0 0.0
        %1883 = vmatprep.subr.mxu0 0.0
        %1884 = vmatpush1.msra.mxu0 0.0
        %1885 = vmatprep.subr.mxu0 0.0
        %1886 = vmatpush1.msra.mxu0 0.0
        %1887 = vmatprep.subr.mxu0 0.0
        %1888 = vmatpush1.msra.mxu0 0.0
        %1889 = vmatprep.subr.mxu0 0.0
        %1890 = vmatpush1.msra.mxu0 0.0
        %1891 = vmatprep.subr.mxu0 0.0
        %1892 = vmatpush1.msra.mxu0 0.0
        %1893 = vmatprep.subr.mxu0 0.0
        %1894 = vmatpush1.msra.mxu0 0.0
        %1895 = vmatprep.subr.mxu0 0.0
        %1896 = vmatpush1.msra.mxu0 0.0
        %1897 = vmatprep.subr.mxu0 0.0
        %1898 = vmatpush1.msra.mxu0 0.0
        %1899 = vmatprep.subr.mxu0 0.0
        %1900 = vmatpush1.msra.mxu0 0.0
        %1901 = vmatprep.mubr.f32.mxu0 %v1833
        %1902 = vmatmul.mubr.f32.gmra.mrb[0].mxu0 %v1690
        %v1903 = vpop.f32.mrb[0].mxu0
        %v1904 = vadd.f32 %v1824, %v1903
        %v1905 = vpop.f32.mrb[0].mxu0
        %1906 = vmatprep.mubr.f32.mxu0 %v1835
        %1907 = vmatmul.mubr.f32.gmra.mrb[0].mxu0 %v1692
        %v1908 = vpop.f32.mrb[0].mxu0
        %v1909 = vadd.f32 %v1829, %v1908
        %v1910 = vpop.f32.mrb[0].mxu0
        %1911 = vdwg.mxu0
        %v1912 = vld [vmem:[#allocation3] sm:$0xfc]
        %v1913 = vld [vmem:[#allocation3 + $0x8] sm:$0xfc]
        %v1914 = vld [vmem:[#allocation3 + $0x20] sm:$0x3]
        %v1915 = vld [vmem:[#allocation3 + $0x28] sm:$0x3]
        %s1916 = scalar_lea.vmem %s6, 288
        %v1917 = vld [vmem:[%s1916] sm:$0xff]
        %v1918 = vld [vmem:[%s1916 + $0x8] sm:$0xff]
        %v1919 = vld [vmem:[%s1916 + $0x10] sm:$0xff]
        %v1920 = vld [vmem:[%s1916 + $0x18] sm:$0xff]
        %v1921 = vld [vmem:[%s1916 + $0x20] sm:$0xff]
        %v1922 = vld [vmem:[%s1916 + $0x28] sm:$0xff]
        %v1923 = vld [vmem:[%s1916 + $0x30] sm:$0xff]
        %v1924 = vld [vmem:[%s1916 + $0x38] sm:$0xff]
        %v1925 = vld [vmem:[%s1916 + $0x40] sm:$0xff]
        %v1926 = vld [vmem:[%s1916 + $0x48] sm:$0xff]
        %v1927 = vld [vmem:[%s1916 + $0x50] sm:$0xff]
        %v1928 = vld [vmem:[%s1916 + $0x58] sm:$0xff]
        %v1929 = vld [vmem:[%s1916 + $0x60] sm:$0xff]
        %v1930 = vld [vmem:[%s1916 + $0x68] sm:$0xff]
        %v1931 = vld [vmem:[%s1916 + $0x70] sm:$0xff]
        %v1932 = vld [vmem:[%s1916 + $0x78] sm:$0xff]
        %v1933 = vld [vmem:[%s1916 + $0x80] sm:$0xff]
        %v1934 = vld [vmem:[%s1916 + $0x88] sm:$0xff]
        %v1939 = vrot.slane %v1912, 2
        %v1940 = vrot.slane %v1692, 2
        %v1941 = vsel %vm1463, %v1939, %v1940
        %v1942 = vrot.slane %v1913, 2
        %v1943 = vrot.slane %v1693, 2
        %v1944 = vsel %vm1463, %v1942, %v1943
        %v1945 = vrot.slane %v1914, 2
        %v1946 = vsel %vm1463, %v1940, %v1945
        %v1947 = vrot.slane %v1915, 2
        %v1948 = vsel %vm1463, %v1943, %v1947
        %v1951 = vsel %vm1685, %v1944, 0
        %v1953 = vsel %vm1685, %v1948, 0
        %1955 = vmatprep.subr.mxu0 0.0
        %1956 = vmatpush1.msra.mxu0 %v1917
        %1957 = vmatprep.subr.mxu0 0.0
        %1958 = vmatpush1.msra.mxu0 %v1918
        %1959 = vmatprep.subr.mxu0 0.0
        %1960 = vmatpush1.msra.mxu0 %v1919
        %1961 = vmatprep.subr.mxu0 0.0
        %1962 = vmatpush1.msra.mxu0 %v1920
        %1963 = vmatprep.subr.mxu0 0.0
        %1964 = vmatpush1.msra.mxu0 %v1921
        %1965 = vmatprep.subr.mxu0 0.0
        %1966 = vmatpush1.msra.mxu0 %v1922
        %1967 = vmatprep.subr.mxu0 0.0
        %1968 = vmatpush1.msra.mxu0 %v1923
        %1969 = vmatprep.subr.mxu0 0.0
        %1970 = vmatpush1.msra.mxu0 %v1924
        %1971 = vmatprep.subr.mxu0 0.0
        %1972 = vmatpush1.msra.mxu0 %v1925
        %1973 = vmatprep.subr.mxu0 0.0
        %1974 = vmatpush1.msra.mxu0 %v1926
        %1975 = vmatprep.subr.mxu0 0.0
        %1976 = vmatpush1.msra.mxu0 %v1927
        %1977 = vmatprep.subr.mxu0 0.0
        %1978 = vmatpush1.msra.mxu0 %v1928
        %1979 = vmatprep.subr.mxu0 0.0
        %1980 = vmatpush1.msra.mxu0 %v1929
        %1981 = vmatprep.subr.mxu0 0.0
        %1982 = vmatpush1.msra.mxu0 %v1930
        %1983 = vmatprep.subr.mxu0 0.0
        %1984 = vmatpush1.msra.mxu0 %v1931
        %1985 = vmatprep.subr.mxu0 0.0
        %1986 = vmatpush1.msra.mxu0 %v1932
        %1987 = vmatprep.subr.mxu0 0.0
        %1988 = vmatpush1.msra.mxu0 %v1933
        %1989 = vmatprep.subr.mxu0 0.0
        %1990 = vmatpush1.msra.mxu0 %v1934
        %1991 = vmatprep.subr.mxu0 0.0
        %1992 = vmatpush1.msra.mxu0 0.0
        %1993 = vmatprep.subr.mxu0 0.0
        %1994 = vmatpush1.msra.mxu0 0.0
        %1995 = vmatprep.subr.mxu0 0.0
        %1996 = vmatpush1.msra.mxu0 0.0
        %1997 = vmatprep.subr.mxu0 0.0
        %1998 = vmatpush1.msra.mxu0 0.0
        %1999 = vmatprep.subr.mxu0 0.0
        %2000 = vmatpush1.msra.mxu0 0.0
        %2001 = vmatprep.subr.mxu0 0.0
        %2002 = vmatpush1.msra.mxu0 0.0
        %2003 = vmatprep.subr.mxu0 0.0
        %2004 = vmatpush1.msra.mxu0 0.0
        %2005 = vmatprep.subr.mxu0 0.0
        %2006 = vmatpush1.msra.mxu0 0.0
        %2007 = vmatprep.subr.mxu0 0.0
        %2008 = vmatpush1.msra.mxu0 0.0
        %2009 = vmatprep.subr.mxu0 0.0
        %2010 = vmatpush1.msra.mxu0 0.0
        %2011 = vmatprep.subr.mxu0 0.0
        %2012 = vmatpush1.msra.mxu0 0.0
        %2013 = vmatprep.subr.mxu0 0.0
        %2014 = vmatpush1.msra.mxu0 0.0
        %2015 = vmatprep.subr.mxu0 0.0
        %2016 = vmatpush1.msra.mxu0 0.0
        %2017 = vmatprep.subr.mxu0 0.0
        %2018 = vmatpush1.msra.mxu0 0.0
        %2019 = vmatprep.mubr.f32.mxu0 %v1951
        %2020 = vmatmul.mubr.f32.gmra.mrb[0].mxu0 %v1941
        %v2021 = vpop.f32.mrb[0].mxu0
        %v2022 = vadd.f32 0.0, %v2021
        %v2023 = vpop.f32.mrb[0].mxu0
        %2024 = vmatprep.mubr.f32.mxu0 %v1953
        %2025 = vmatmul.mubr.f32.gmra.mrb[0].mxu0 %v1946
        %v2026 = vpop.f32.mrb[0].mxu0
        %v2027 = vadd.f32 0.0, %v2026
        %v2028 = vpop.f32.mrb[0].mxu0
        %2029 = vdwg.mxu0
        %v2030 = vadd.f32 %v1904, %v2022
        %v2031 = vadd.f32 %v1909, %v2027
        %v2032 = vld [vmem:[%s8] sm:$0x1]
        %v2034 = vlaneseq
        %v2035 = vshrl.u32 %v2034, 7
        %v2036 = vsub.s32 0, %v2035
        %v2037 = vrot.slane %v2032, %v2036
        %v2039 = vadd.f32 %v2030, %v2037
        %v2040 = vadd.f32 %v2031, %v2037
        %v2041 = vmax.f32 %v2039, 0.0
        %v2042 = vmax.f32 %v2040, 0.0
        %2043 = vst [vmem:[%s338] sm:$0xff] %v2041
        %2044 = vst [vmem:[%s338 + $0x8] sm:$0xff] %v2042
        %s2045 = sand.u32 %s230, 1
        %s2046 = scalar_lea.sflag [#allocation5], %s2045
        %s2047 = sand.u32 %s230, 1
        %s2048 = smul.addr %s2047, 16
        %s2049 = scalar_lea.vmem [#allocation4], %s2048
        // Predicated region
        $region61: #{tpu_custom_call.1} parent=55 // pred_check
          %p2050 = pneg %p240
        $region62: #{tpu_custom_call.1} parent=55 // pred_check_branch
          %2052 = sbr.rel (%p2050) target = $region64
        $region63: #{tpu_custom_call.1} parent=55 // pred_region
          %s2054 = ssub.s32 256, 256
          %2055 = vsyncadd %s2046, %s2054
          %s2056 = smul.addr %s23, 2
          %s2057 = smul.addr %s2056, 128
          %s2058 = scalar_lea.hbm %s9, %s2057
          %s2059 = sshll.u32 %s2049, 4
          %s2060 = int_to_ptr.vmem [resolvable:$true] %s2059
          %2065 = dma.vmem_to_hbm [thread:$0]  %s2060, 256, %s2058, %s2046, 128, 128, 8
        $region64: #{tpu_custom_call.1} parent=55 // pred_fallthru
          _
      $region56: #{tpu_custom_call.1} parent=5 // pred_fallthru
        _
      %p2066 = scmp.le.s32.totalorder 2, %s18
      // Predicated region
      $region65: #{tpu_custom_call.1} parent=5 // pred_check
        %p2067 = pneg %p2066
      $region66: #{tpu_custom_call.1} parent=5 // pred_check_branch
        %2069 = sbr.rel (%p2067) target = $region68
      $region67: #{tpu_custom_call.1} parent=5 // pred_region
        %s2070 = ssub.s32 %s18, 2
        // Predicated region
        $region69: #{tpu_custom_call.1} parent=67 // pred_check
          %p2071 = pneg %p246
        $region70: #{tpu_custom_call.1} parent=67 // pred_check_branch
          %2073 = sbr.rel (%p2071) target = $region72
        $region71: #{tpu_custom_call.1} parent=67 // pred_region
          %s2074 = sand.u32 %s231, 1
          %s2075 = scalar_lea.sflag [#allocation5], %s2074
          %s2076 = sand.u32 %s231, 1
          %s2077 = smul.addr %s2076, 16
          %s2078 = scalar_lea.vmem [#allocation4], %s2077
          %2079 = dma.done %s2075, 256
        $region72: #{tpu_custom_call.1} parent=67 // pred_fallthru
          _
      $region68: #{tpu_custom_call.1} parent=5 // pred_fallthru
        _
    $region6: #{tpu_custom_call.1} parent=1 // loop_footer
      %s22 = sadd.s32 1, %s18
    $region7: #{tpu_custom_call.1} parent=1 // loop_footer_branch
      %17 = sbr.rel target = $region3
    $region8: #{tpu_custom_call.1} parent=1 // loop_exit
      _
    %2080 = vsyncpa [#allocation5], 1
    %s2081 = scalar_lea.sflag [#allocation5], 1
    %2082 = vsyncpa %s2081, 1

</llo_original>
